<compile_context>
chip_gen: v5e
topology: v5e:2x2
jax: 0.10.0
libtpu: 0.0.40
codegen_flags: <defaults>
</compile_context>

<pallas_src>
import functools

import jax
import jax.numpy as jnp
from jax.experimental import pallas as pl
from jax.experimental.pallas import tpu as pltpu


# ----------------------------------------------------------------------------
# Fused Pallas kernel
# ----------------------------------------------------------------------------
def _fused_protein_encoder_kernel(
    x_ref,      # (TB, C_in, L)       input block, PyTorch NCL layout
    wc_ref,     # (K_max*C_in, F)     all conv weights (zero-padded taps, concat convs)
    bc_ref,     # (1, F)  f32         conv biases (concat)
    lim_ref,    # (1, F)  int32       valid conv length (L - K_i + 1) per feature col
    wf_ref,     # (F, H)              fc weight
    bf_ref,     # (1, H)  f32         fc bias
    o_ref,      # (TB, H) f32         output block
    *,
    l_block: int,
):
    tb, c_in, seq_len = x_ref.shape
    kc, feat_dim = wc_ref.shape
    k_max = kc // c_in

    # NCL -> NLC once, inside VMEM (no standalone XLA transpose / extra HBM pass).
    x = jnp.transpose(x_ref[...].astype(wc_ref.dtype), (0, 2, 1))  # (TB, L, C_in)

    # Zero-pad the sequence so every L-chunk can read a full im2col window; padded
    # positions are masked to -inf below, so the pad never leaks into the max pool.
    num_chunks = -(-seq_len // l_block)
    padded_len = num_chunks * l_block + k_max - 1
    pad_rows = padded_len - seq_len
    if pad_rows:
        x = jnp.concatenate([x, jnp.zeros((tb, pad_rows, c_in), x.dtype)], axis=1)

    lim = lim_ref[...]      # (1, F) int32
    # Hoisted out of the chunk loop (JAX does not CSE broadcast_in_dim / iota).
    pos_base = jax.lax.broadcasted_iota(jnp.int32, (tb, l_block, feat_dim), 1)

    # Running global-max-pool accumulator (bounds VMEM w.r.t. sequence length).
    feat = jnp.full((tb, feat_dim), -jnp.inf, jnp.float32)

    for c in range(num_chunks):
        p0 = c * l_block
        xc = x[:, p0 : p0 + l_block + k_max - 1, :]       # (TB, TL+K_max-1, C_in)
        # im2col slab: slab[b, p, t*C_in + ci] = x[b, p0 + p + t, ci]
        slab = jnp.concatenate(
            [xc[:, t : t + l_block, :] for t in range(k_max)], axis=-1
        )                                                  # (TB, TL, K_max*C_in)
        # ONE MXU matmul for ALL conv branches, contraction depth K_max*C_in.
        z = jnp.dot(
            slab.reshape(tb * l_block, kc), wc_ref[...],
            preferred_element_type=jnp.float32,
        ).reshape(tb, l_block, feat_dim)                   # (TB, TL, F) f32
        # Mask conv positions outside each conv's valid ("VALID" padding) range.
        z = jnp.where(pos_base + p0 < lim, z, -jnp.inf)
        feat = jnp.maximum(feat, jnp.max(z, axis=1))       # running global max pool

    # Per-channel bias commutes with the max pool: max(conv) + b == max(conv + b).
    feat = feat + bc_ref[...]                               # (TB, F) f32

    # FC + LeakyReLU(0.01). Matmul in the weights' dtype (f32 or bf16), f32 accumulate
    # and f32 elementwise epilogue (v5e VPU has no bf16 datapath).
    y = jnp.dot(
        feat.astype(wf_ref.dtype), wf_ref[...],
        preferred_element_type=jnp.float32,
    ) + bf_ref[...]
    o_ref[...] = jnp.maximum(y, 0.01 * y).astype(o_ref.dtype)


# ----------------------------------------------------------------------------
# Wrapper: one pallas_call for the whole forward
# ----------------------------------------------------------------------------
def protein_encoder_forward(x_ncl, fused, *, batch_block=None, l_block=None):
    """x_ncl: (B, C_in, L) in PyTorch NCL layout. `fused` from fuse_params()."""
    b, c_in, seq_len = x_ncl.shape
    w_cat, b_cat = fused["w_cat"], fused["b_cat"]
    limits, fc_w, fc_b = fused["limits"], fused["fc_w"], fused["fc_b"]
    kc, feat_dim = w_cat.shape
    hidden = fc_w.shape[1]
    k_max = kc // c_in
    assert k_max <= seq_len, "largest conv kernel must not exceed seq_length"

    # Batch tile: full batch for small B, else blocks of 8 (keeps the (8,128) output
    # tiling rule satisfied). L chunk bounds the in-kernel (TL, F) activation.
    if batch_block is None:
        batch_block = 8 if (b > 8 and b % 8 == 0) else b
    assert b % batch_block == 0
    if l_block is None:
        l_block = min(seq_len, 512)
    num_chunks = -(-seq_len // l_block)
    grid = (pl.cdiv(b, batch_block),)

    itemsize = lambda a: a.size * a.dtype.itemsize
    cost = pl.CostEstimate(
        flops=2 * b * num_chunks * l_block * kc * feat_dim + 2 * b * feat_dim * hidden,
        transcendentals=0,
        bytes_accessed=(itemsize(x_ncl) + itemsize(w_cat) + itemsize(b_cat)
                        + itemsize(limits) + itemsize(fc_w) + itemsize(fc_b)
                        + b * hidden * 4),
    )

    kernel = functools.partial(_fused_protein_encoder_kernel, l_block=l_block)

    # TODO(synk): for extremely long sequences, add an L grid axis with a halo'd
    # manual DMA + running-max scratch so the per-batch x block is also tiled.
    return pl.pallas_call(
        kernel,
        out_shape=jax.ShapeDtypeStruct((b, hidden), jnp.float32),
        grid_spec=pltpu.PrefetchScalarGridSpec(
            num_scalar_prefetch=0,
            grid=grid,
            in_specs=[
                pl.BlockSpec((batch_block, c_in, seq_len), lambda i: (i, 0, 0)),
                pl.BlockSpec((kc, feat_dim), lambda i: (0, 0)),
                pl.BlockSpec((1, feat_dim), lambda i: (0, 0)),
                pl.BlockSpec((1, feat_dim), lambda i: (0, 0)),
                pl.BlockSpec((feat_dim, hidden), lambda i: (0, 0)),
                pl.BlockSpec((1, hidden), lambda i: (0, 0)),
            ],
            out_specs=pl.BlockSpec((batch_block, hidden), lambda i: (i, 0)),
        ),
        compiler_params=pltpu.CompilerParams(
            dimension_semantics=("parallel",),      # shard batch blocks across TCs (v7x)
            vmem_limit_bytes=64 * 1024 * 1024,
        ),
        cost_estimate=cost,
    )(x_ncl, w_cat, b_cat, limits, fc_w, fc_b)


# ----------------------------------------------------------------------------
# Parameter construction (shapes follow the nn.Module __init__) and fusion prep
# ----------------------------------------------------------------------------
def make_params(key, kernels, c_in, c_out, hidden_dim):
    params = {"convs": []}
    for k in kernels:
        key, kw, kb = jax.random.split(key, 3)
        bound = 1.0 / jnp.sqrt(c_in * k)
        w = jax.random.uniform(kw, (k, c_in, c_out), jnp.float32, -bound, bound)
        b = jax.random.uniform(kb, (c_out,), jnp.float32, -bound, bound)
        params["convs"].append((w, b))
    f = len(kernels) * c_out
    key, kw, kb = jax.random.split(key, 3)
    bound = 1.0 / jnp.sqrt(f)
    params["fc_w"] = jax.random.uniform(kw, (f, hidden_dim), jnp.float32, -bound, bound)
    params["fc_b"] = jax.random.uniform(kb, (hidden_dim,), jnp.float32, -bound, bound)
    return params


def fuse_params(params, seq_len, *, compute_dtype=jnp.float32):
    """One-time prep: pad each conv weight to K_max taps, reshape to (K*C_in, C_out),
    concat all convs along output columns; biases / valid-length limits alongside."""
    kernels = [w.shape[0] for (w, _) in params["convs"]]
    c_in = params["convs"][0][0].shape[1]
    c_out = params["convs"][0][0].shape[2]
    k_max = max(kernels)

    w_blocks, b_list, lim_list = [], [], []
    for k, (w, bias) in zip(kernels, params["convs"]):
        w2 = w.reshape(k * c_in, c_out)                        # row index = t*C_in + c
        w2 = jnp.pad(w2, ((0, (k_max - k) * c_in), (0, 0)))    # zero taps beyond K_i
        w_blocks.append(w2)
        b_list.append(bias)
        lim_list.append(jnp.full((c_out,), seq_len - k + 1, jnp.int32))

    return {
        "w_cat": jnp.concatenate(w_blocks, axis=1).astype(compute_dtype),
        "b_cat": jnp.concatenate(b_list).reshape(1, -1).astype(jnp.float32),
        "limits": jnp.concatenate(lim_list).reshape(1, -1),
        "fc_w": params["fc_w"].astype(compute_dtype),
        "fc_b": params["fc_b"].reshape(1, -1).astype(jnp.float32),
    }


# ----------------------------------------------------------------------------
# Pure-JAX reference (for correctness check)
# ----------------------------------------------------------------------------
def reference_forward(x_ncl, params):
    feats = []
    for (w, b) in params["convs"]:
        w_oiw = jnp.transpose(w, (2, 1, 0))  # (C_out, C_in, K)
        y = jax.lax.conv_general_dilated(
            x_ncl, w_oiw, window_strides=(1,), padding="VALID",
            dimension_numbers=("NCH", "OIH", "NCH"),
        )
        y = y + b[None, :, None]
        feats.append(jnp.max(y, axis=2))
    f = jnp.concatenate(feats, axis=1)
    z = f @ params["fc_w"] + params["fc_b"]
    return jnp.where(z > 0, z, 0.01 * z)


# ----------------------------------------------------------------------------
if __name__ == "__main__":
    # Small shapes consistent with the module's forward:
    #   seq_input_nc (C_in) = 4, seq_in_nc (C_out) = 16,
    #   seq_max_kernels = 17 -> kernels [8, 16], seq_length = 32, hidden_dim = 32.
    B, C_IN, C_OUT, L, HIDDEN = 16, 4, 16, 32, 32
    SEQ_MAX_KERNELS = 17
    kernels = list(range(8, SEQ_MAX_KERNELS, 8))  # [8, 16]

    key = jax.random.PRNGKey(0)
    key, kx = jax.random.split(key)
    x = jax.random.normal(kx, (B, C_IN, L), jnp.float32)  # PyTorch NCL input
    params = make_params(key, kernels, C_IN, C_OUT, HIDDEN)

    ref = jax.block_until_ready(reference_forward(x, params))

    # f32 path: strict check against the reference.
    fused_f32 = fuse_params(params, L, compute_dtype=jnp.float32)
    out_f32 = jax.block_until_ready(protein_encoder_forward(x, fused_f32))
    assert out_f32.shape == (B, HIDDEN), out_f32.shape
    assert jnp.allclose(out_f32, ref, rtol=1e-4, atol=1e-5), (
        float(jnp.max(jnp.abs(out_f32 - ref)))
    )

    # bf16 matmul operands / f32 accumulation path (v6e/v7x MXU fast path): loose check.
    fused_bf16 = fuse_params(params, L, compute_dtype=jnp.bfloat16)
    out_bf16 = jax.block_until_ready(
        protein_encoder_forward(x.astype(jnp.bfloat16), fused_bf16))
    assert jnp.allclose(out_bf16, ref, rtol=5e-2, atol=5e-2), (
        float(jnp.max(jnp.abs(out_bf16 - ref)))
    )

    print("KERNEL_OK")
</pallas_src>

<mosaic_0001>
module attributes {stable_mosaic.version = 11 : i64} {
  func.func @_fused_protein_encoder_kernel(%arg0: i32, %arg1: memref<8x4x32xf32, #tpu.memory_space<vmem>>, %arg2: memref<64x32xf32, #tpu.memory_space<vmem>>, %arg3: memref<1x32xf32, #tpu.memory_space<vmem>>, %arg4: memref<1x32xi32, #tpu.memory_space<vmem>>, %arg5: memref<32x32xf32, #tpu.memory_space<vmem>>, %arg6: memref<1x32xf32, #tpu.memory_space<vmem>>, %arg7: memref<8x32xf32, #tpu.memory_space<vmem>>) attributes {dimension_semantics = [#tpu.dimension_semantics<parallel>], iteration_bounds = array<i64: 2>, scalar_prefetch = 0 : i64, scratch_operands = 0 : i64, tpu.core_type = #tpu.core_type<tc>, window_params = [{transform_indices = @transform_0, window_bounds = array<i64: 8, 4, 32>}, {pipeline_mode = #tpu.pipeline_mode<synchronous>, transform_indices = @transform_1, window_bounds = array<i64: 64, 32>}, {pipeline_mode = #tpu.pipeline_mode<synchronous>, transform_indices = @transform_2, window_bounds = array<i64: 1, 32>}, {pipeline_mode = #tpu.pipeline_mode<synchronous>, transform_indices = @transform_3, window_bounds = array<i64: 1, 32>}, {pipeline_mode = #tpu.pipeline_mode<synchronous>, transform_indices = @transform_4, window_bounds = array<i64: 32, 32>}, {pipeline_mode = #tpu.pipeline_mode<synchronous>, transform_indices = @transform_5, window_bounds = array<i64: 1, 32>}, {transform_indices = @transform_6, window_bounds = array<i64: 8, 32>}]} {
    %c0 = arith.constant 0 : index
    %c0_0 = arith.constant 0 : index
    %c0_1 = arith.constant 0 : index
    %0 = vector.load %arg1[%c0, %c0_0, %c0_1] : memref<8x4x32xf32, #tpu.memory_space<vmem>>, vector<8x4x32xf32>
    %1 = tpu.transpose %0, [0, 2, 1] : vector<8x4x32xf32> -> vector<8x32x4xf32>
    %cst = arith.constant 0.000000e+00 : f32
    %2 = vector.broadcast %cst : f32 to vector<8x15x4xf32>
    %3 = tpu.concatenate %1, %2 in 1 : vector<8x32x4xf32>, vector<8x15x4xf32> -> vector<8x47x4xf32>
    %c0_2 = arith.constant 0 : index
    %c0_3 = arith.constant 0 : index
    %4 = vector.load %arg4[%c0_2, %c0_3] : memref<1x32xi32, #tpu.memory_space<vmem>>, vector<1x32xi32>
    %5 = tpu.iota {dimensions = array<i32: 1>} : vector<8x32x32xi32>
    %cst_4 = arith.constant 0xFF800000 : f32
    %6 = vector.broadcast %cst_4 : f32 to vector<8x32xf32>
    %7 = vector.extract_strided_slice %3 {offsets = [0, 0, 0], sizes = [8, 32, 4], strides = [1, 1, 1]} : vector<8x47x4xf32> to vector<8x32x4xf32>
    %8 = vector.extract_strided_slice %3 {offsets = [0, 1, 0], sizes = [8, 32, 4], strides = [1, 1, 1]} : vector<8x47x4xf32> to vector<8x32x4xf32>
    %9 = vector.extract_strided_slice %3 {offsets = [0, 2, 0], sizes = [8, 32, 4], strides = [1, 1, 1]} : vector<8x47x4xf32> to vector<8x32x4xf32>
    %10 = vector.extract_strided_slice %3 {offsets = [0, 3, 0], sizes = [8, 32, 4], strides = [1, 1, 1]} : vector<8x47x4xf32> to vector<8x32x4xf32>
    %11 = vector.extract_strided_slice %3 {offsets = [0, 4, 0], sizes = [8, 32, 4], strides = [1, 1, 1]} : vector<8x47x4xf32> to vector<8x32x4xf32>
    %12 = vector.extract_strided_slice %3 {offsets = [0, 5, 0], sizes = [8, 32, 4], strides = [1, 1, 1]} : vector<8x47x4xf32> to vector<8x32x4xf32>
    %13 = vector.extract_strided_slice %3 {offsets = [0, 6, 0], sizes = [8, 32, 4], strides = [1, 1, 1]} : vector<8x47x4xf32> to vector<8x32x4xf32>
    %14 = vector.extract_strided_slice %3 {offsets = [0, 7, 0], sizes = [8, 32, 4], strides = [1, 1, 1]} : vector<8x47x4xf32> to vector<8x32x4xf32>
    %15 = vector.extract_strided_slice %3 {offsets = [0, 8, 0], sizes = [8, 32, 4], strides = [1, 1, 1]} : vector<8x47x4xf32> to vector<8x32x4xf32>
    %16 = vector.extract_strided_slice %3 {offsets = [0, 9, 0], sizes = [8, 32, 4], strides = [1, 1, 1]} : vector<8x47x4xf32> to vector<8x32x4xf32>
    %17 = vector.extract_strided_slice %3 {offsets = [0, 10, 0], sizes = [8, 32, 4], strides = [1, 1, 1]} : vector<8x47x4xf32> to vector<8x32x4xf32>
    %18 = vector.extract_strided_slice %3 {offsets = [0, 11, 0], sizes = [8, 32, 4], strides = [1, 1, 1]} : vector<8x47x4xf32> to vector<8x32x4xf32>
    %19 = vector.extract_strided_slice %3 {offsets = [0, 12, 0], sizes = [8, 32, 4], strides = [1, 1, 1]} : vector<8x47x4xf32> to vector<8x32x4xf32>
    %20 = vector.extract_strided_slice %3 {offsets = [0, 13, 0], sizes = [8, 32, 4], strides = [1, 1, 1]} : vector<8x47x4xf32> to vector<8x32x4xf32>
    %21 = vector.extract_strided_slice %3 {offsets = [0, 14, 0], sizes = [8, 32, 4], strides = [1, 1, 1]} : vector<8x47x4xf32> to vector<8x32x4xf32>
    %22 = vector.extract_strided_slice %3 {offsets = [0, 15, 0], sizes = [8, 32, 4], strides = [1, 1, 1]} : vector<8x47x4xf32> to vector<8x32x4xf32>
    %23 = tpu.concatenate %7, %8, %9, %10, %11, %12, %13, %14, %15, %16, %17, %18, %19, %20, %21, %22 in 2 : vector<8x32x4xf32>, vector<8x32x4xf32>, vector<8x32x4xf32>, vector<8x32x4xf32>, vector<8x32x4xf32>, vector<8x32x4xf32>, vector<8x32x4xf32>, vector<8x32x4xf32>, vector<8x32x4xf32>, vector<8x32x4xf32>, vector<8x32x4xf32>, vector<8x32x4xf32>, vector<8x32x4xf32>, vector<8x32x4xf32>, vector<8x32x4xf32>, vector<8x32x4xf32> -> vector<8x32x64xf32>
    %24 = vector.shape_cast %23 : vector<8x32x64xf32> to vector<256x64xf32>
    %c0_5 = arith.constant 0 : index
    %c0_6 = arith.constant 0 : index
    %25 = vector.load %arg2[%c0_5, %c0_6] : memref<64x32xf32, #tpu.memory_space<vmem>>, vector<64x32xf32>
    %cst_7 = arith.constant dense<0.000000e+00> : vector<256x32xf32>
    %26 = tpu.matmul %24, %25, %cst_7 {dimension_numbers = #tpu.dot_dimension_numbers<[1], [0], [0], [1], [0, 0, 1, 1], [], []>} : vector<256x64xf32>, vector<64x32xf32>, vector<256x32xf32> -> vector<256x32xf32>
    %27 = vector.shape_cast %26 : vector<256x32xf32> to vector<8x32x32xf32>
    %c0_i32 = arith.constant 0 : i32
    %28 = vector.broadcast %c0_i32 : i32 to vector<8x32x32xi32>
    %29 = arith.addi %5, %28 : vector<8x32x32xi32>
    %30 = vector.shape_cast %4 : vector<1x32xi32> to vector<1x1x32xi32>
    %31 = vector.broadcast %30 : vector<1x1x32xi32> to vector<8x32x32xi32>
    %32 = arith.cmpi slt, %29, %31 : vector<8x32x32xi32>
    %cst_8 = arith.constant 0xFF800000 : f32
    %33 = vector.broadcast %cst_8 : f32 to vector<8x32x32xf32>
    %34 = arith.select %32, %27, %33 : vector<8x32x32xi1>, vector<8x32x32xf32>
    %cst_9 = arith.constant dense<0xFF800000> : vector<8x32xf32>
    %35 = vector.multi_reduction <maximumf>, %34, %cst_9 [1] : vector<8x32x32xf32> to vector<8x32xf32>
    %36 = arith.maximumf %6, %35 : vector<8x32xf32>
    %c0_10 = arith.constant 0 : index
    %c0_11 = arith.constant 0 : index
    %37 = vector.load %arg3[%c0_10, %c0_11] : memref<1x32xf32, #tpu.memory_space<vmem>>, vector<1x32xf32>
    %38 = vector.broadcast %37 : vector<1x32xf32> to vector<8x32xf32>
    %39 = arith.addf %36, %38 : vector<8x32xf32>
    %c0_12 = arith.constant 0 : index
    %c0_13 = arith.constant 0 : index
    %40 = vector.load %arg5[%c0_12, %c0_13] : memref<32x32xf32, #tpu.memory_space<vmem>>, vector<32x32xf32>
    %cst_14 = arith.constant dense<0.000000e+00> : vector<8x32xf32>
    %41 = tpu.matmul %39, %40, %cst_14 {dimension_numbers = #tpu.dot_dimension_numbers<[1], [0], [0], [1], [0, 0, 1, 1], [], []>} : vector<8x32xf32>, vector<32x32xf32>, vector<8x32xf32> -> vector<8x32xf32>
    %c0_15 = arith.constant 0 : index
    %c0_16 = arith.constant 0 : index
    %42 = vector.load %arg6[%c0_15, %c0_16] : memref<1x32xf32, #tpu.memory_space<vmem>>, vector<1x32xf32>
    %43 = vector.broadcast %42 : vector<1x32xf32> to vector<8x32xf32>
    %44 = arith.addf %41, %43 : vector<8x32xf32>
    %cst_17 = arith.constant 0.00999999977 : f32
    %45 = vector.broadcast %cst_17 : f32 to vector<8x32xf32>
    %46 = arith.mulf %45, %44 : vector<8x32xf32>
    %47 = arith.maximumf %44, %46 : vector<8x32xf32>
    %c0_18 = arith.constant 0 : index
    %c0_19 = arith.constant 0 : index
    %48 = vector.load %arg7[%c0_18, %c0_19] : memref<8x32xf32, #tpu.memory_space<vmem>>, vector<8x32xf32>
    tpu.vector_store %arg7[%c0_18, %c0_19], %47 {strides = array<i32>} : memref<8x32xf32, #tpu.memory_space<vmem>>, vector<8x32xf32>,
    return
  }
  func.func @transform_0(%arg0: i32) -> (i32, i32, i32) {
    %c0_i32 = arith.constant 0 : i32
    %c0_i32_0 = arith.constant 0 : i32
    %c0_i32_1 = arith.constant 0 : i32
    return %arg0, %c0_i32, %c0_i32_0 : i32, i32, i32
  }
  func.func @transform_1(%arg0: i32) -> (i32, i32) {
    %c0_i32 = arith.constant 0 : i32
    %c0_i32_0 = arith.constant 0 : i32
    %c0_i32_1 = arith.constant 0 : i32
    return %c0_i32, %c0_i32_0 : i32, i32
  }
  func.func @transform_2(%arg0: i32) -> (i32, i32) {
    %c0_i32 = arith.constant 0 : i32
    %c0_i32_0 = arith.constant 0 : i32
    %c0_i32_1 = arith.constant 0 : i32
    return %c0_i32, %c0_i32_0 : i32, i32
  }
  func.func @transform_3(%arg0: i32) -> (i32, i32) {
    %c0_i32 = arith.constant 0 : i32
    %c0_i32_0 = arith.constant 0 : i32
    %c0_i32_1 = arith.constant 0 : i32
    return %c0_i32, %c0_i32_0 : i32, i32
  }
  func.func @transform_4(%arg0: i32) -> (i32, i32) {
    %c0_i32 = arith.constant 0 : i32
    %c0_i32_0 = arith.constant 0 : i32
    %c0_i32_1 = arith.constant 0 : i32
    return %c0_i32, %c0_i32_0 : i32, i32
  }
  func.func @transform_5(%arg0: i32) -> (i32, i32) {
    %c0_i32 = arith.constant 0 : i32
    %c0_i32_0 = arith.constant 0 : i32
    %c0_i32_1 = arith.constant 0 : i32
    return %c0_i32, %c0_i32_0 : i32, i32
  }
  func.func @transform_6(%arg0: i32) -> (i32, i32) {
    %c0_i32 = arith.constant 0 : i32
    %c0_i32_0 = arith.constant 0 : i32
    return %arg0, %c0_i32 : i32, i32
  }
}

</mosaic_0001>

<llo_original>
// kernel: tpu_custom_call.1
$region0: #{tpu_custom_call.1}
  #allocation0 [shape = 'u32[]', space=smem, size = 0x4, offset = 0x4, fixed_abs, tag = 'smem constant byte address 0x4 - core index']
  #allocation1 [shape = 'u32[72,128]{1,0:T(1,128)}', space=vmem, size = 0x9000, scoped, tag = 'internal scratch']
  %s0 = inlined_call_operand.vmem [shape: f32[16,4,32], index: 0, kind: input, shape index: {}]
  %s1 = inlined_call_operand.vmem [shape: f32[64,32], index: 1, kind: input, shape index: {}]
  %s2 = inlined_call_operand.vmem [shape: f32[1,32], index: 2, kind: input, shape index: {}]
  %s3 = inlined_call_operand.hbm [shape: s32[1,32], index: 3, kind: input, shape index: {}]
  %s4 = inlined_call_operand.vmem [shape: f32[32,32], index: 4, kind: input, shape index: {}]
  %s5 = inlined_call_operand.vmem [shape: f32[1,32], index: 5, kind: input, shape index: {}]
  %s6 = inlined_call_operand.hbm [shape: f32[16,32], index: 6, kind: output, shape index: {}]
  %s7 = sld [smem:[#allocation0]]
  $region61: #{tpu_custom_call.1} parent=0
    _
  %s9 = ssub.s32 1, %s7
  %s10 = scalar_select 0, %s9, %s7
  $region1: #{tpu_custom_call.1} parent=0
    #allocation2 [shape = 'u8[512]{0}', space=vmem, size = 0x400, scoped, tag = 'input window, operand 3, single buffered']
    #allocation3 [shape = 's32[2]{0}', space=sflag, size = 0x8, scoped, tag = 'scoped memory for tpu_custom_call.1']
    #allocation4 [shape = 's32[2]{0}', space=sflag, size = 0x8, scoped, tag = 'scoped memory for tpu_custom_call.1']
    #allocation5 [shape = 'u8[8192]{0}', space=vmem, size = 0x2000, scoped, tag = 'output window, operand 0']
    %11 = vsyncpa [#allocation3], 0
    %12 = vsyncpa [#allocation4], 0
    %s13 = scalar_lea.sflag [#allocation4], 1
    %14 = vsyncpa %s13, 0
    loop: start=0, step=1, limit=4
    $region2: #{tpu_custom_call.1} parent=1 // loop_pre_header
      _
    $region3: #{tpu_custom_call.1} parent=1 // loop_header
      %s16 = sphi 0, %s20
      %p17 = scmp.ge.s32.totalorder %s16, 4
      %s26 = sphi 0, %s28
      %s29 = sphi 0, %s26
      %s30 = sphi 0, %s29
      %s46 = sphi 0, %s30
      %s50 = sphi 0, %s50
      %s52 = sphi 0, %s50
      %s53 = sphi 0, %s52
      %s67 = sphi 0, %s53
      %s71 = sphi 0, %s71
      %s73 = sphi 0, %s71
      %s74 = sphi 0, %s73
      %s88 = sphi 0, %s74
      %s92 = sphi 0, %s92
      %s94 = sphi 0, %s92
      %s95 = sphi 0, %s94
      %s109 = sphi 0, %s95
      %s113 = sphi 0, %s113
      %s115 = sphi 0, %s113
      %s116 = sphi 0, %s115
      %s130 = sphi 0, %s116
      %s134 = sphi 0, %s134
      %s136 = sphi 0, %s134
      %s137 = sphi 0, %s136
      %s151 = sphi 0, %s137
      %s157 = sphi 0, %s159
      %s160 = sphi 0, %s157
      %s161 = sphi 0, %s160
      %s177 = sphi 0, %s161
    $region4: #{tpu_custom_call.1} parent=1 // loop_header_branch
      %19 = sbr.rel (%p17) target = $region8
    $region5: #{tpu_custom_call.1} parent=1 // loop_body
      %s21 = ssub.s32 %s16, 1
      %s22 = ssub.s32 %s16, 2
      %s23 = sadd.s32 %s16, 1
      %s24 = ssub.s32 %s16, %s23
      %p25 = scmp.eq.s32.totalorder %s24, 0
      %s27 = sadd.s32 %s26, 1
      %s28 = scalar_select %p25, %s26, %s27
      %p31 = pneg %p25
      %p32 = scmp.eq.s32.totalorder %s16, 1
      %p33 = por %p31, %p32
      %p34 = scmp.ne.s32.totalorder %s26, %s29
      %p35 = scmp.eq.s32.totalorder %s16, 0
      %p36 = por %p34, %p35
      %p37 = scmp.ne.s32.totalorder %s26, %s29
      %p38 = scmp.eq.s32.totalorder %s21, 1
      %p39 = por %p37, %p38
      %p40 = scmp.ne.s32.totalorder %s29, %s30
      %p41 = scmp.eq.s32.totalorder %s21, 0
      %p42 = por %p40, %p41
      %p43 = scmp.ne.s32.totalorder %s29, %s30
      %p44 = scmp.eq.s32.totalorder %s22, 1
      %p45 = por %p43, %p44
      %p47 = scmp.ne.s32.totalorder %s30, %s46
      %p48 = scmp.eq.s32.totalorder %s22, 0
      %p49 = por %p47, %p48
      %s51 = sadd.s32 %s50, 1
      %p54 = scmp.eq.s32.totalorder %s16, 1
      %p55 = scmp.ne.s32.totalorder %s50, %s52
      %p56 = scmp.eq.s32.totalorder %s16, 0
      %p57 = por %p55, %p56
      %p58 = scmp.ne.s32.totalorder %s50, %s52
      %p59 = scmp.eq.s32.totalorder %s21, 1
      %p60 = por %p58, %p59
      %p61 = scmp.ne.s32.totalorder %s52, %s53
      %p62 = scmp.eq.s32.totalorder %s21, 0
      %p63 = por %p61, %p62
      %p64 = scmp.ne.s32.totalorder %s52, %s53
      %p65 = scmp.eq.s32.totalorder %s22, 1
      %p66 = por %p64, %p65
      %p68 = scmp.ne.s32.totalorder %s53, %s67
      %p69 = scmp.eq.s32.totalorder %s22, 0
      %p70 = por %p68, %p69
      %s72 = sadd.s32 %s71, 1
      %p75 = scmp.eq.s32.totalorder %s16, 1
      %p76 = scmp.ne.s32.totalorder %s71, %s73
      %p77 = scmp.eq.s32.totalorder %s16, 0
      %p78 = por %p76, %p77
      %p79 = scmp.ne.s32.totalorder %s71, %s73
      %p80 = scmp.eq.s32.totalorder %s21, 1
      %p81 = por %p79, %p80
      %p82 = scmp.ne.s32.totalorder %s73, %s74
      %p83 = scmp.eq.s32.totalorder %s21, 0
      %p84 = por %p82, %p83
      %p85 = scmp.ne.s32.totalorder %s73, %s74
      %p86 = scmp.eq.s32.totalorder %s22, 1
      %p87 = por %p85, %p86
      %p89 = scmp.ne.s32.totalorder %s74, %s88
      %p90 = scmp.eq.s32.totalorder %s22, 0
      %p91 = por %p89, %p90
      %s93 = sadd.s32 %s92, 1
      %p96 = scmp.eq.s32.totalorder %s16, 1
      %p97 = scmp.ne.s32.totalorder %s92, %s94
      %p98 = scmp.eq.s32.totalorder %s16, 0
      %p99 = por %p97, %p98
      %p100 = scmp.ne.s32.totalorder %s92, %s94
      %p101 = scmp.eq.s32.totalorder %s21, 1
      %p102 = por %p100, %p101
      %p103 = scmp.ne.s32.totalorder %s94, %s95
      %p104 = scmp.eq.s32.totalorder %s21, 0
      %p105 = por %p103, %p104
      %p106 = scmp.ne.s32.totalorder %s94, %s95
      %p107 = scmp.eq.s32.totalorder %s22, 1
      %p108 = por %p106, %p107
      %p110 = scmp.ne.s32.totalorder %s95, %s109
      %p111 = scmp.eq.s32.totalorder %s22, 0
      %p112 = por %p110, %p111
      %s114 = sadd.s32 %s113, 1
      %p117 = scmp.eq.s32.totalorder %s16, 1
      %p118 = scmp.ne.s32.totalorder %s113, %s115
      %p119 = scmp.eq.s32.totalorder %s16, 0
      %p120 = por %p118, %p119
      %p121 = scmp.ne.s32.totalorder %s113, %s115
      %p122 = scmp.eq.s32.totalorder %s21, 1
      %p123 = por %p121, %p122
      %p124 = scmp.ne.s32.totalorder %s115, %s116
      %p125 = scmp.eq.s32.totalorder %s21, 0
      %p126 = por %p124, %p125
      %p127 = scmp.ne.s32.totalorder %s115, %s116
      %p128 = scmp.eq.s32.totalorder %s22, 1
      %p129 = por %p127, %p128
      %p131 = scmp.ne.s32.totalorder %s116, %s130
      %p132 = scmp.eq.s32.totalorder %s22, 0
      %p133 = por %p131, %p132
      %s135 = sadd.s32 %s134, 1
      %p138 = scmp.eq.s32.totalorder %s16, 1
      %p139 = scmp.ne.s32.totalorder %s134, %s136
      %p140 = scmp.eq.s32.totalorder %s16, 0
      %p141 = por %p139, %p140
      %p142 = scmp.ne.s32.totalorder %s134, %s136
      %p143 = scmp.eq.s32.totalorder %s21, 1
      %p144 = por %p142, %p143
      %p145 = scmp.ne.s32.totalorder %s136, %s137
      %p146 = scmp.eq.s32.totalorder %s21, 0
      %p147 = por %p145, %p146
      %p148 = scmp.ne.s32.totalorder %s136, %s137
      %p149 = scmp.eq.s32.totalorder %s22, 1
      %p150 = por %p148, %p149
      %p152 = scmp.ne.s32.totalorder %s137, %s151
      %p153 = scmp.eq.s32.totalorder %s22, 0
      %p154 = por %p152, %p153
      %s155 = ssub.s32 %s16, %s23
      %p156 = scmp.eq.s32.totalorder %s155, 0
      %s158 = sadd.s32 %s157, 1
      %s159 = scalar_select %p156, %s157, %s158
      %p162 = pneg %p156
      %p163 = scmp.eq.s32.totalorder %s16, 1
      %p164 = por %p162, %p163
      %p165 = scmp.ne.s32.totalorder %s157, %s160
      %p166 = scmp.eq.s32.totalorder %s16, 0
      %p167 = por %p165, %p166
      %p168 = scmp.ne.s32.totalorder %s157, %s160
      %p169 = scmp.eq.s32.totalorder %s21, 1
      %p170 = por %p168, %p169
      %p171 = scmp.ne.s32.totalorder %s160, %s161
      %p172 = scmp.eq.s32.totalorder %s21, 0
      %p173 = por %p171, %p172
      %p174 = scmp.ne.s32.totalorder %s160, %s161
      %p175 = scmp.eq.s32.totalorder %s22, 1
      %p176 = por %p174, %p175
      %p178 = scmp.ne.s32.totalorder %s161, %s177
      %p179 = scmp.eq.s32.totalorder %s22, 0
      %p180 = por %p178, %p179
      %p181 = scmp.le.s32.totalorder 1, %s16
      %p182 = scmp.lt.s32.totalorder %s16, 3
      %p183 = pnand %p181, %p182
      %p184 = pneg %p183
      // Predicated region
      $region9: #{tpu_custom_call.1} parent=5 // pred_check
        _
      $region10: #{tpu_custom_call.1} parent=5 // pred_check_branch
        %186 = sbr.rel (%p183) target = $region12
      $region11: #{tpu_custom_call.1} parent=5 // pred_region
        %s187 = ssub.s32 %s16, 1
        // Predicated region
        $region13: #{tpu_custom_call.1} parent=11 // pred_check
          %p188 = pneg %p63
        $region14: #{tpu_custom_call.1} parent=11 // pred_check_branch
          %190 = sbr.rel (%p188) target = $region16
        $region15: #{tpu_custom_call.1} parent=11 // pred_region
          _
        $region16: #{tpu_custom_call.1} parent=11 // pred_fallthru
          _
        // Predicated region
        $region17: #{tpu_custom_call.1} parent=11 // pred_check
          %p191 = pneg %p84
        $region18: #{tpu_custom_call.1} parent=11 // pred_check_branch
          %193 = sbr.rel (%p191) target = $region20
        $region19: #{tpu_custom_call.1} parent=11 // pred_region
          _
        $region20: #{tpu_custom_call.1} parent=11 // pred_fallthru
          _
        // Predicated region
        $region21: #{tpu_custom_call.1} parent=11 // pred_check
          %p194 = pneg %p105
        $region22: #{tpu_custom_call.1} parent=11 // pred_check_branch
          %196 = sbr.rel (%p194) target = $region24
        $region23: #{tpu_custom_call.1} parent=11 // pred_region
          %198 = vsyncadd [#allocation3], 0
          %s200 = sshll.u32 %s3, 4
          %s201 = int_to_ptr.hbm [resolvable:$true] %s200
          %s202 = sshll.u32 [#allocation2], 4
          %s203 = int_to_ptr.vmem [resolvable:$true] %s202
          %205 = dma.hbm_to_vmem [thread:$0]  %s201, 16, %s203, [#allocation3]
        $region24: #{tpu_custom_call.1} parent=11 // pred_fallthru
          _
        // Predicated region
        $region25: #{tpu_custom_call.1} parent=11 // pred_check
          %p206 = pneg %p126
        $region26: #{tpu_custom_call.1} parent=11 // pred_check_branch
          %208 = sbr.rel (%p206) target = $region28
        $region27: #{tpu_custom_call.1} parent=11 // pred_region
          _
        $region28: #{tpu_custom_call.1} parent=11 // pred_fallthru
          _
        // Predicated region
        $region29: #{tpu_custom_call.1} parent=11 // pred_check
          %p209 = pneg %p147
        $region30: #{tpu_custom_call.1} parent=11 // pred_check_branch
          %211 = sbr.rel (%p209) target = $region32
        $region31: #{tpu_custom_call.1} parent=11 // pred_region
          _
        $region32: #{tpu_custom_call.1} parent=11 // pred_fallthru
          _
      $region12: #{tpu_custom_call.1} parent=5 // pred_fallthru
        _
      %p212 = scmp.lt.s32.totalorder %s16, 2
      // Predicated region
      $region33: #{tpu_custom_call.1} parent=5 // pred_check
        %p213 = pneg %p212
      $region34: #{tpu_custom_call.1} parent=5 // pred_check_branch
        %215 = sbr.rel (%p213) target = $region36
      $region35: #{tpu_custom_call.1} parent=5 // pred_region
        // Predicated region
        $region37: #{tpu_custom_call.1} parent=35 // pred_check
          %p216 = pneg %p36
        $region38: #{tpu_custom_call.1} parent=35 // pred_check_branch
          %218 = sbr.rel (%p216) target = $region40
        $region39: #{tpu_custom_call.1} parent=35 // pred_region
          %s219 = smul.u32 8, %s16
          %p220 = scmp.lt.s32.totalorder %s219, 15
          %s221 = scalar_select %p220, %s219, 15
          %s222 = smul.addr %s221, 4
          %s223 = scalar_lea.vmem %s0, %s222
          %s224 = smul.u32 8, %s16
        $region40: #{tpu_custom_call.1} parent=35 // pred_fallthru
          _
      $region36: #{tpu_custom_call.1} parent=5 // pred_fallthru
        _
      %p225 = scmp.le.s32.totalorder 1, %s16
      %p226 = scmp.lt.s32.totalorder %s16, 3
      %p227 = pnand %p225, %p226
      %p228 = pneg %p227
      // Predicated region
      $region41: #{tpu_custom_call.1} parent=5 // pred_check
        _
      $region42: #{tpu_custom_call.1} parent=5 // pred_check_branch
        %230 = sbr.rel (%p227) target = $region44
      $region43: #{tpu_custom_call.1} parent=5 // pred_region
        %s231 = ssub.s32 %s16, 1
        // Predicated region
        $region45: #{tpu_custom_call.1} parent=43 // pred_check
          %p232 = pneg %p105
        $region46: #{tpu_custom_call.1} parent=43 // pred_check_branch
          %234 = sbr.rel (%p232) target = $region48
        $region47: #{tpu_custom_call.1} parent=43 // pred_region
          %236 = dma.done [#allocation3], 16
        $region48: #{tpu_custom_call.1} parent=43 // pred_fallthru
          _
        %s237 = smul.u32 8, %s21
        %p238 = scmp.lt.s32.totalorder %s237, 15
        %s239 = scalar_select %p238, %s237, 15
        %s240 = smul.addr %s239, 4
        %s241 = scalar_lea.vmem %s0, %s240
        %p242 = pneg %p42
        %p243 = pneg %p39
        %p244 = pneg %p63
        %p245 = pneg %p60
        %p246 = pneg %p84
        %p247 = pneg %p81
        %p248 = pneg %p105
        %p249 = pneg %p102
        %p250 = pneg %p126
        %p251 = pneg %p123
        %p252 = pneg %p147
        %p253 = pneg %p144
        %p254 = pneg %p173
        %p255 = pneg %p170
        %s256 = sand.u32 %s160, 1
        %s257 = scalar_lea.sflag [#allocation4], %s256
        %s258 = sand.u32 %s160, 1
        %s259 = smul.addr %s258, 8
        %s260 = scalar_lea.vmem [#allocation5], %s259
        %s261 = smul.u32 8, %s21
        %p262 = scmp.lt.s32.totalorder %s261, 15
        %s263 = scalar_select %p262, %s261, 15
        %s264 = smul.addr %s263, 4
        %s265 = scalar_lea.vmem %s0, %s264
        %s266 = smul.u32 8, %s21
        %v267 = vld [vmem:[%s265] sm:$0xf]
        %v268 = vld [vmem:[%s265 + $0x4] sm:$0xf]
        %v269 = vld [vmem:[%s265 + $0x8] sm:$0xf]
        %v270 = vld [vmem:[%s265 + $0xc] sm:$0xf]
        %v271 = vld [vmem:[%s265 + $0x10] sm:$0xf]
        %v272 = vld [vmem:[%s265 + $0x14] sm:$0xf]
        %v273 = vld [vmem:[%s265 + $0x18] sm:$0xf]
        %v274 = vld [vmem:[%s265 + $0x1c] sm:$0xf]
        %275 = vxpose.xlu0.b32.start [1/16] %v267, 128
        %276 = vxpose.xlu0.b32.cont [2/16] 0.0, 128
        %277 = vxpose.xlu0.b32.cont [3/16] 0.0, 128
        %278 = vxpose.xlu0.b32.cont [4/16] 0.0, 128
        %279 = vxpose.xlu0.b32.cont [5/16] 0.0, 128
        %280 = vxpose.xlu0.b32.cont [6/16] 0.0, 128
        %281 = vxpose.xlu0.b32.cont [7/16] 0.0, 128
        %282 = vxpose.xlu0.b32.cont [8/16] 0.0, 128
        %283 = vxpose.xlu0.b32.cont [9/16] 0.0, 128
        %284 = vxpose.xlu0.b32.cont [10/16] 0.0, 128
        %285 = vxpose.xlu0.b32.cont [11/16] 0.0, 128
        %286 = vxpose.xlu0.b32.cont [12/16] 0.0, 128
        %287 = vxpose.xlu0.b32.cont [13/16] 0.0, 128
        %288 = vxpose.xlu0.b32.cont [14/16] 0.0, 128
        %289 = vxpose.xlu0.b32.cont [15/16] 0.0, 128
        %290 = vxpose.xlu0.b32.end [16/16] 0.0, 128
        %v291 = vpop.trf.xlu0
        %v292 = vpop.trf.xlu0
        %v293 = vpop.trf.xlu0
        %v294 = vpop.trf.xlu0
        %v295 = vpop.trf.xlu0
        %v296 = vpop.trf.xlu0
        %v297 = vpop.trf.xlu0
        %v298 = vpop.trf.xlu0
        %v299 = vpop.trf.xlu0
        %v300 = vpop.trf.xlu0
        %v301 = vpop.trf.xlu0
        %v302 = vpop.trf.xlu0
        %v303 = vpop.trf.xlu0
        %v304 = vpop.trf.xlu0
        %v305 = vpop.trf.xlu0
        %v306 = vpop.trf.xlu0
        %307 = vxpose.xlu0.b32.start [1/16] %v268, 128
        %308 = vxpose.xlu0.b32.cont [2/16] 0.0, 128
        %309 = vxpose.xlu0.b32.cont [3/16] 0.0, 128
        %310 = vxpose.xlu0.b32.cont [4/16] 0.0, 128
        %311 = vxpose.xlu0.b32.cont [5/16] 0.0, 128
        %312 = vxpose.xlu0.b32.cont [6/16] 0.0, 128
        %313 = vxpose.xlu0.b32.cont [7/16] 0.0, 128
        %314 = vxpose.xlu0.b32.cont [8/16] 0.0, 128
        %315 = vxpose.xlu0.b32.cont [9/16] 0.0, 128
        %316 = vxpose.xlu0.b32.cont [10/16] 0.0, 128
        %317 = vxpose.xlu0.b32.cont [11/16] 0.0, 128
        %318 = vxpose.xlu0.b32.cont [12/16] 0.0, 128
        %319 = vxpose.xlu0.b32.cont [13/16] 0.0, 128
        %320 = vxpose.xlu0.b32.cont [14/16] 0.0, 128
        %321 = vxpose.xlu0.b32.cont [15/16] 0.0, 128
        %322 = vxpose.xlu0.b32.end [16/16] 0.0, 128
        %v323 = vpop.trf.xlu0
        %v324 = vpop.trf.xlu0
        %v325 = vpop.trf.xlu0
        %v326 = vpop.trf.xlu0
        %v327 = vpop.trf.xlu0
        %v328 = vpop.trf.xlu0
        %v329 = vpop.trf.xlu0
        %v330 = vpop.trf.xlu0
        %v331 = vpop.trf.xlu0
        %v332 = vpop.trf.xlu0
        %v333 = vpop.trf.xlu0
        %v334 = vpop.trf.xlu0
        %v335 = vpop.trf.xlu0
        %v336 = vpop.trf.xlu0
        %v337 = vpop.trf.xlu0
        %v338 = vpop.trf.xlu0
        %339 = vxpose.xlu0.b32.start [1/16] %v269, 128
        %340 = vxpose.xlu0.b32.cont [2/16] 0.0, 128
        %341 = vxpose.xlu0.b32.cont [3/16] 0.0, 128
        %342 = vxpose.xlu0.b32.cont [4/16] 0.0, 128
        %343 = vxpose.xlu0.b32.cont [5/16] 0.0, 128
        %344 = vxpose.xlu0.b32.cont [6/16] 0.0, 128
        %345 = vxpose.xlu0.b32.cont [7/16] 0.0, 128
        %346 = vxpose.xlu0.b32.cont [8/16] 0.0, 128
        %347 = vxpose.xlu0.b32.cont [9/16] 0.0, 128
        %348 = vxpose.xlu0.b32.cont [10/16] 0.0, 128
        %349 = vxpose.xlu0.b32.cont [11/16] 0.0, 128
        %350 = vxpose.xlu0.b32.cont [12/16] 0.0, 128
        %351 = vxpose.xlu0.b32.cont [13/16] 0.0, 128
        %352 = vxpose.xlu0.b32.cont [14/16] 0.0, 128
        %353 = vxpose.xlu0.b32.cont [15/16] 0.0, 128
        %354 = vxpose.xlu0.b32.end [16/16] 0.0, 128
        %v355 = vpop.trf.xlu0
        %v356 = vpop.trf.xlu0
        %v357 = vpop.trf.xlu0
        %v358 = vpop.trf.xlu0
        %v359 = vpop.trf.xlu0
        %v360 = vpop.trf.xlu0
        %v361 = vpop.trf.xlu0
        %v362 = vpop.trf.xlu0
        %v363 = vpop.trf.xlu0
        %v364 = vpop.trf.xlu0
        %v365 = vpop.trf.xlu0
        %v366 = vpop.trf.xlu0
        %v367 = vpop.trf.xlu0
        %v368 = vpop.trf.xlu0
        %v369 = vpop.trf.xlu0
        %v370 = vpop.trf.xlu0
        %371 = vxpose.xlu0.b32.start [1/16] %v270, 128
        %372 = vxpose.xlu0.b32.cont [2/16] 0.0, 128
        %373 = vxpose.xlu0.b32.cont [3/16] 0.0, 128
        %374 = vxpose.xlu0.b32.cont [4/16] 0.0, 128
        %375 = vxpose.xlu0.b32.cont [5/16] 0.0, 128
        %376 = vxpose.xlu0.b32.cont [6/16] 0.0, 128
        %377 = vxpose.xlu0.b32.cont [7/16] 0.0, 128
        %378 = vxpose.xlu0.b32.cont [8/16] 0.0, 128
        %379 = vxpose.xlu0.b32.cont [9/16] 0.0, 128
        %380 = vxpose.xlu0.b32.cont [10/16] 0.0, 128
        %381 = vxpose.xlu0.b32.cont [11/16] 0.0, 128
        %382 = vxpose.xlu0.b32.cont [12/16] 0.0, 128
        %383 = vxpose.xlu0.b32.cont [13/16] 0.0, 128
        %384 = vxpose.xlu0.b32.cont [14/16] 0.0, 128
        %385 = vxpose.xlu0.b32.cont [15/16] 0.0, 128
        %386 = vxpose.xlu0.b32.end [16/16] 0.0, 128
        %v387 = vpop.trf.xlu0
        %v388 = vpop.trf.xlu0
        %v389 = vpop.trf.xlu0
        %v390 = vpop.trf.xlu0
        %v391 = vpop.trf.xlu0
        %v392 = vpop.trf.xlu0
        %v393 = vpop.trf.xlu0
        %v394 = vpop.trf.xlu0
        %v395 = vpop.trf.xlu0
        %v396 = vpop.trf.xlu0
        %v397 = vpop.trf.xlu0
        %v398 = vpop.trf.xlu0
        %v399 = vpop.trf.xlu0
        %v400 = vpop.trf.xlu0
        %v401 = vpop.trf.xlu0
        %v402 = vpop.trf.xlu0
        %403 = vxpose.xlu0.b32.start [1/16] %v271, 128
        %404 = vxpose.xlu0.b32.cont [2/16] 0.0, 128
        %405 = vxpose.xlu0.b32.cont [3/16] 0.0, 128
        %406 = vxpose.xlu0.b32.cont [4/16] 0.0, 128
        %407 = vxpose.xlu0.b32.cont [5/16] 0.0, 128
        %408 = vxpose.xlu0.b32.cont [6/16] 0.0, 128
        %409 = vxpose.xlu0.b32.cont [7/16] 0.0, 128
        %410 = vxpose.xlu0.b32.cont [8/16] 0.0, 128
        %411 = vxpose.xlu0.b32.cont [9/16] 0.0, 128
        %412 = vxpose.xlu0.b32.cont [10/16] 0.0, 128
        %413 = vxpose.xlu0.b32.cont [11/16] 0.0, 128
        %414 = vxpose.xlu0.b32.cont [12/16] 0.0, 128
        %415 = vxpose.xlu0.b32.cont [13/16] 0.0, 128
        %416 = vxpose.xlu0.b32.cont [14/16] 0.0, 128
        %417 = vxpose.xlu0.b32.cont [15/16] 0.0, 128
        %418 = vxpose.xlu0.b32.end [16/16] 0.0, 128
        %v419 = vpop.trf.xlu0
        %v420 = vpop.trf.xlu0
        %v421 = vpop.trf.xlu0
        %v422 = vpop.trf.xlu0
        %v423 = vpop.trf.xlu0
        %v424 = vpop.trf.xlu0
        %v425 = vpop.trf.xlu0
        %v426 = vpop.trf.xlu0
        %v427 = vpop.trf.xlu0
        %v428 = vpop.trf.xlu0
        %v429 = vpop.trf.xlu0
        %v430 = vpop.trf.xlu0
        %v431 = vpop.trf.xlu0
        %v432 = vpop.trf.xlu0
        %v433 = vpop.trf.xlu0
        %v434 = vpop.trf.xlu0
        %435 = vxpose.xlu0.b32.start [1/16] %v272, 128
        %436 = vxpose.xlu0.b32.cont [2/16] 0.0, 128
        %437 = vxpose.xlu0.b32.cont [3/16] 0.0, 128
        %438 = vxpose.xlu0.b32.cont [4/16] 0.0, 128
        %439 = vxpose.xlu0.b32.cont [5/16] 0.0, 128
        %440 = vxpose.xlu0.b32.cont [6/16] 0.0, 128
        %441 = vxpose.xlu0.b32.cont [7/16] 0.0, 128
        %442 = vxpose.xlu0.b32.cont [8/16] 0.0, 128
        %443 = vxpose.xlu0.b32.cont [9/16] 0.0, 128
        %444 = vxpose.xlu0.b32.cont [10/16] 0.0, 128
        %445 = vxpose.xlu0.b32.cont [11/16] 0.0, 128
        %446 = vxpose.xlu0.b32.cont [12/16] 0.0, 128
        %447 = vxpose.xlu0.b32.cont [13/16] 0.0, 128
        %448 = vxpose.xlu0.b32.cont [14/16] 0.0, 128
        %449 = vxpose.xlu0.b32.cont [15/16] 0.0, 128
        %450 = vxpose.xlu0.b32.end [16/16] 0.0, 128
        %v451 = vpop.trf.xlu0
        %v452 = vpop.trf.xlu0
        %v453 = vpop.trf.xlu0
        %v454 = vpop.trf.xlu0
        %v455 = vpop.trf.xlu0
        %v456 = vpop.trf.xlu0
        %v457 = vpop.trf.xlu0
        %v458 = vpop.trf.xlu0
        %v459 = vpop.trf.xlu0
        %v460 = vpop.trf.xlu0
        %v461 = vpop.trf.xlu0
        %v462 = vpop.trf.xlu0
        %v463 = vpop.trf.xlu0
        %v464 = vpop.trf.xlu0
        %v465 = vpop.trf.xlu0
        %v466 = vpop.trf.xlu0
        %467 = vxpose.xlu0.b32.start [1/16] %v273, 128
        %468 = vxpose.xlu0.b32.cont [2/16] 0.0, 128
        %469 = vxpose.xlu0.b32.cont [3/16] 0.0, 128
        %470 = vxpose.xlu0.b32.cont [4/16] 0.0, 128
        %471 = vxpose.xlu0.b32.cont [5/16] 0.0, 128
        %472 = vxpose.xlu0.b32.cont [6/16] 0.0, 128
        %473 = vxpose.xlu0.b32.cont [7/16] 0.0, 128
        %474 = vxpose.xlu0.b32.cont [8/16] 0.0, 128
        %475 = vxpose.xlu0.b32.cont [9/16] 0.0, 128
        %476 = vxpose.xlu0.b32.cont [10/16] 0.0, 128
        %477 = vxpose.xlu0.b32.cont [11/16] 0.0, 128
        %478 = vxpose.xlu0.b32.cont [12/16] 0.0, 128
        %479 = vxpose.xlu0.b32.cont [13/16] 0.0, 128
        %480 = vxpose.xlu0.b32.cont [14/16] 0.0, 128
        %481 = vxpose.xlu0.b32.cont [15/16] 0.0, 128
        %482 = vxpose.xlu0.b32.end [16/16] 0.0, 128
        %v483 = vpop.trf.xlu0
        %v484 = vpop.trf.xlu0
        %v485 = vpop.trf.xlu0
        %v486 = vpop.trf.xlu0
        %v487 = vpop.trf.xlu0
        %v488 = vpop.trf.xlu0
        %v489 = vpop.trf.xlu0
        %v490 = vpop.trf.xlu0
        %v491 = vpop.trf.xlu0
        %v492 = vpop.trf.xlu0
        %v493 = vpop.trf.xlu0
        %v494 = vpop.trf.xlu0
        %v495 = vpop.trf.xlu0
        %v496 = vpop.trf.xlu0
        %v497 = vpop.trf.xlu0
        %v498 = vpop.trf.xlu0
        %499 = vxpose.xlu0.b32.start [1/16] %v274, 128
        %500 = vxpose.xlu0.b32.cont [2/16] 0.0, 128
        %501 = vxpose.xlu0.b32.cont [3/16] 0.0, 128
        %502 = vxpose.xlu0.b32.cont [4/16] 0.0, 128
        %503 = vxpose.xlu0.b32.cont [5/16] 0.0, 128
        %504 = vxpose.xlu0.b32.cont [6/16] 0.0, 128
        %505 = vxpose.xlu0.b32.cont [7/16] 0.0, 128
        %506 = vxpose.xlu0.b32.cont [8/16] 0.0, 128
        %507 = vxpose.xlu0.b32.cont [9/16] 0.0, 128
        %508 = vxpose.xlu0.b32.cont [10/16] 0.0, 128
        %509 = vxpose.xlu0.b32.cont [11/16] 0.0, 128
        %510 = vxpose.xlu0.b32.cont [12/16] 0.0, 128
        %511 = vxpose.xlu0.b32.cont [13/16] 0.0, 128
        %512 = vxpose.xlu0.b32.cont [14/16] 0.0, 128
        %513 = vxpose.xlu0.b32.cont [15/16] 0.0, 128
        %514 = vxpose.xlu0.b32.end [16/16] 0.0, 128
        %v515 = vpop.trf.xlu0
        %v516 = vpop.trf.xlu0
        %v517 = vpop.trf.xlu0
        %v518 = vpop.trf.xlu0
        %v519 = vpop.trf.xlu0
        %v520 = vpop.trf.xlu0
        %v521 = vpop.trf.xlu0
        %v522 = vpop.trf.xlu0
        %v523 = vpop.trf.xlu0
        %v524 = vpop.trf.xlu0
        %v525 = vpop.trf.xlu0
        %v526 = vpop.trf.xlu0
        %v527 = vpop.trf.xlu0
        %v528 = vpop.trf.xlu0
        %v529 = vpop.trf.xlu0
        %v530 = vpop.trf.xlu0
        %v531 = vld [vmem:[#allocation2] sm:$0x1]
        %v532 = vlaneseq
        %v533 = vshrl.u32 %v532, 7
        %v534 = vadd.s32 %v533, 8
        %v535 = vadd.s32 %v533, 16
        %v536 = vadd.s32 %v533, 24
        %vm570 = vcmask 1046528
        %v571 = vrot.slane %v291, 1
        %v572 = vrot.slane %v292, 1
        %v573 = vsel %vm570, %v571, %v572
        %v574 = vrot.slane %v293, 1
        %v575 = vsel %vm570, %v572, %v574
        %v576 = vrot.slane %v294, 1
        %v577 = vsel %vm570, %v574, %v576
        %v578 = vrot.slane 0.0, 1
        %v579 = vsel %vm570, %v576, %v578
        %v580 = vrot.slane %v323, 1
        %v581 = vrot.slane %v324, 1
        %v582 = vsel %vm570, %v580, %v581
        %v583 = vrot.slane %v325, 1
        %v584 = vsel %vm570, %v581, %v583
        %v585 = vrot.slane %v326, 1
        %v586 = vsel %vm570, %v583, %v585
        %v587 = vsel %vm570, %v585, %v578
        %v588 = vrot.slane %v355, 1
        %v589 = vrot.slane %v356, 1
        %v590 = vsel %vm570, %v588, %v589
        %v591 = vrot.slane %v357, 1
        %v592 = vsel %vm570, %v589, %v591
        %v593 = vrot.slane %v358, 1
        %v594 = vsel %vm570, %v591, %v593
        %v595 = vsel %vm570, %v593, %v578
        %v596 = vrot.slane %v387, 1
        %v597 = vrot.slane %v388, 1
        %v598 = vsel %vm570, %v596, %v597
        %v599 = vrot.slane %v389, 1
        %v600 = vsel %vm570, %v597, %v599
        %v601 = vrot.slane %v390, 1
        %v602 = vsel %vm570, %v599, %v601
        %v603 = vsel %vm570, %v601, %v578
        %v604 = vrot.slane %v419, 1
        %v605 = vrot.slane %v420, 1
        %v606 = vsel %vm570, %v604, %v605
        %v607 = vrot.slane %v421, 1
        %v608 = vsel %vm570, %v605, %v607
        %v609 = vrot.slane %v422, 1
        %v610 = vsel %vm570, %v607, %v609
        %v611 = vsel %vm570, %v609, %v578
        %v612 = vrot.slane %v451, 1
        %v613 = vrot.slane %v452, 1
        %v614 = vsel %vm570, %v612, %v613
        %v615 = vrot.slane %v453, 1
        %v616 = vsel %vm570, %v613, %v615
        %v617 = vrot.slane %v454, 1
        %v618 = vsel %vm570, %v615, %v617
        %v619 = vsel %vm570, %v617, %v578
        %v620 = vrot.slane %v483, 1
        %v621 = vrot.slane %v484, 1
        %v622 = vsel %vm570, %v620, %v621
        %v623 = vrot.slane %v485, 1
        %v624 = vsel %vm570, %v621, %v623
        %v625 = vrot.slane %v486, 1
        %v626 = vsel %vm570, %v623, %v625
        %v627 = vsel %vm570, %v625, %v578
        %v628 = vrot.slane %v515, 1
        %v629 = vrot.slane %v516, 1
        %v630 = vsel %vm570, %v628, %v629
        %v631 = vrot.slane %v517, 1
        %v632 = vsel %vm570, %v629, %v631
        %v633 = vrot.slane %v518, 1
        %v634 = vsel %vm570, %v631, %v633
        %v635 = vsel %vm570, %v633, %v578
        %636 = vrot.lane.b32.xlu0 %v573, 4
        %v637 = vpop.permute.xlu0 %636
        %638 = vrot.lane.b32.xlu0 %v575, 4
        %v639 = vpop.permute.xlu0 %638
        %640 = vrot.lane.b32.xlu0 %v577, 4
        %v641 = vpop.permute.xlu0 %640
        %642 = vrot.lane.b32.xlu0 %v579, 4
        %v643 = vpop.permute.xlu0 %642
        %644 = vrot.lane.b32.xlu0 %v582, 4
        %v645 = vpop.permute.xlu0 %644
        %646 = vrot.lane.b32.xlu0 %v584, 4
        %v647 = vpop.permute.xlu0 %646
        %648 = vrot.lane.b32.xlu0 %v586, 4
        %v649 = vpop.permute.xlu0 %648
        %650 = vrot.lane.b32.xlu0 %v587, 4
        %v651 = vpop.permute.xlu0 %650
        %652 = vrot.lane.b32.xlu0 %v590, 4
        %v653 = vpop.permute.xlu0 %652
        %654 = vrot.lane.b32.xlu0 %v592, 4
        %v655 = vpop.permute.xlu0 %654
        %656 = vrot.lane.b32.xlu0 %v594, 4
        %v657 = vpop.permute.xlu0 %656
        %658 = vrot.lane.b32.xlu0 %v595, 4
        %v659 = vpop.permute.xlu0 %658
        %660 = vrot.lane.b32.xlu0 %v598, 4
        %v661 = vpop.permute.xlu0 %660
        %662 = vrot.lane.b32.xlu0 %v600, 4
        %v663 = vpop.permute.xlu0 %662
        %664 = vrot.lane.b32.xlu0 %v602, 4
        %v665 = vpop.permute.xlu0 %664
        %666 = vrot.lane.b32.xlu0 %v603, 4
        %v667 = vpop.permute.xlu0 %666
        %668 = vrot.lane.b32.xlu0 %v606, 4
        %v669 = vpop.permute.xlu0 %668
        %670 = vrot.lane.b32.xlu0 %v608, 4
        %v671 = vpop.permute.xlu0 %670
        %672 = vrot.lane.b32.xlu0 %v610, 4
        %v673 = vpop.permute.xlu0 %672
        %674 = vrot.lane.b32.xlu0 %v611, 4
        %v675 = vpop.permute.xlu0 %674
        %676 = vrot.lane.b32.xlu0 %v614, 4
        %v677 = vpop.permute.xlu0 %676
        %678 = vrot.lane.b32.xlu0 %v616, 4
        %v679 = vpop.permute.xlu0 %678
        %680 = vrot.lane.b32.xlu0 %v618, 4
        %v681 = vpop.permute.xlu0 %680
        %682 = vrot.lane.b32.xlu0 %v619, 4
        %v683 = vpop.permute.xlu0 %682
        %684 = vrot.lane.b32.xlu0 %v622, 4
        %v685 = vpop.permute.xlu0 %684
        %686 = vrot.lane.b32.xlu0 %v624, 4
        %v687 = vpop.permute.xlu0 %686
        %688 = vrot.lane.b32.xlu0 %v626, 4
        %v689 = vpop.permute.xlu0 %688
        %690 = vrot.lane.b32.xlu0 %v627, 4
        %v691 = vpop.permute.xlu0 %690
        %692 = vrot.lane.b32.xlu0 %v630, 4
        %v693 = vpop.permute.xlu0 %692
        %694 = vrot.lane.b32.xlu0 %v632, 4
        %v695 = vpop.permute.xlu0 %694
        %696 = vrot.lane.b32.xlu0 %v634, 4
        %v697 = vpop.permute.xlu0 %696
        %698 = vrot.lane.b32.xlu0 %v635, 4
        %v699 = vpop.permute.xlu0 %698
        %vm732 = vcmask 1045504
        %v733 = vrot.slane %v291, 2
        %v734 = vrot.slane %v292, 2
        %v735 = vsel %vm732, %v733, %v734
        %v736 = vrot.slane %v293, 2
        %v737 = vsel %vm732, %v734, %v736
        %v738 = vrot.slane %v294, 2
        %v739 = vsel %vm732, %v736, %v738
        %v740 = vrot.slane 0.0, 2
        %v741 = vsel %vm732, %v738, %v740
        %v742 = vrot.slane %v323, 2
        %v743 = vrot.slane %v324, 2
        %v744 = vsel %vm732, %v742, %v743
        %v745 = vrot.slane %v325, 2
        %v746 = vsel %vm732, %v743, %v745
        %v747 = vrot.slane %v326, 2
        %v748 = vsel %vm732, %v745, %v747
        %v749 = vsel %vm732, %v747, %v740
        %v750 = vrot.slane %v355, 2
        %v751 = vrot.slane %v356, 2
        %v752 = vsel %vm732, %v750, %v751
        %v753 = vrot.slane %v357, 2
        %v754 = vsel %vm732, %v751, %v753
        %v755 = vrot.slane %v358, 2
        %v756 = vsel %vm732, %v753, %v755
        %v757 = vsel %vm732, %v755, %v740
        %v758 = vrot.slane %v387, 2
        %v759 = vrot.slane %v388, 2
        %v760 = vsel %vm732, %v758, %v759
        %v761 = vrot.slane %v389, 2
        %v762 = vsel %vm732, %v759, %v761
        %v763 = vrot.slane %v390, 2
        %v764 = vsel %vm732, %v761, %v763
        %v765 = vsel %vm732, %v763, %v740
        %v766 = vrot.slane %v419, 2
        %v767 = vrot.slane %v420, 2
        %v768 = vsel %vm732, %v766, %v767
        %v769 = vrot.slane %v421, 2
        %v770 = vsel %vm732, %v767, %v769
        %v771 = vrot.slane %v422, 2
        %v772 = vsel %vm732, %v769, %v771
        %v773 = vsel %vm732, %v771, %v740
        %v774 = vrot.slane %v451, 2
        %v775 = vrot.slane %v452, 2
        %v776 = vsel %vm732, %v774, %v775
        %v777 = vrot.slane %v453, 2
        %v778 = vsel %vm732, %v775, %v777
        %v779 = vrot.slane %v454, 2
        %v780 = vsel %vm732, %v777, %v779
        %v781 = vsel %vm732, %v779, %v740
        %v782 = vrot.slane %v483, 2
        %v783 = vrot.slane %v484, 2
        %v784 = vsel %vm732, %v782, %v783
        %v785 = vrot.slane %v485, 2
        %v786 = vsel %vm732, %v783, %v785
        %v787 = vrot.slane %v486, 2
        %v788 = vsel %vm732, %v785, %v787
        %v789 = vsel %vm732, %v787, %v740
        %v790 = vrot.slane %v515, 2
        %v791 = vrot.slane %v516, 2
        %v792 = vsel %vm732, %v790, %v791
        %v793 = vrot.slane %v517, 2
        %v794 = vsel %vm732, %v791, %v793
        %v795 = vrot.slane %v518, 2
        %v796 = vsel %vm732, %v793, %v795
        %v797 = vsel %vm732, %v795, %v740
        %798 = vrot.lane.b32.xlu0 %v735, 8
        %v799 = vpop.permute.xlu0 %798
        %800 = vrot.lane.b32.xlu0 %v737, 8
        %v801 = vpop.permute.xlu0 %800
        %802 = vrot.lane.b32.xlu0 %v739, 8
        %v803 = vpop.permute.xlu0 %802
        %804 = vrot.lane.b32.xlu0 %v741, 8
        %v805 = vpop.permute.xlu0 %804
        %806 = vrot.lane.b32.xlu0 %v744, 8
        %v807 = vpop.permute.xlu0 %806
        %808 = vrot.lane.b32.xlu0 %v746, 8
        %v809 = vpop.permute.xlu0 %808
        %810 = vrot.lane.b32.xlu0 %v748, 8
        %v811 = vpop.permute.xlu0 %810
        %812 = vrot.lane.b32.xlu0 %v749, 8
        %v813 = vpop.permute.xlu0 %812
        %814 = vrot.lane.b32.xlu0 %v752, 8
        %v815 = vpop.permute.xlu0 %814
        %816 = vrot.lane.b32.xlu0 %v754, 8
        %v817 = vpop.permute.xlu0 %816
        %818 = vrot.lane.b32.xlu0 %v756, 8
        %v819 = vpop.permute.xlu0 %818
        %820 = vrot.lane.b32.xlu0 %v757, 8
        %v821 = vpop.permute.xlu0 %820
        %822 = vrot.lane.b32.xlu0 %v760, 8
        %v823 = vpop.permute.xlu0 %822
        %824 = vrot.lane.b32.xlu0 %v762, 8
        %v825 = vpop.permute.xlu0 %824
        %826 = vrot.lane.b32.xlu0 %v764, 8
        %v827 = vpop.permute.xlu0 %826
        %828 = vrot.lane.b32.xlu0 %v765, 8
        %v829 = vpop.permute.xlu0 %828
        %830 = vrot.lane.b32.xlu0 %v768, 8
        %v831 = vpop.permute.xlu0 %830
        %832 = vrot.lane.b32.xlu0 %v770, 8
        %v833 = vpop.permute.xlu0 %832
        %834 = vrot.lane.b32.xlu0 %v772, 8
        %v835 = vpop.permute.xlu0 %834
        %836 = vrot.lane.b32.xlu0 %v773, 8
        %v837 = vpop.permute.xlu0 %836
        %838 = vrot.lane.b32.xlu0 %v776, 8
        %v839 = vpop.permute.xlu0 %838
        %840 = vrot.lane.b32.xlu0 %v778, 8
        %v841 = vpop.permute.xlu0 %840
        %842 = vrot.lane.b32.xlu0 %v780, 8
        %v843 = vpop.permute.xlu0 %842
        %844 = vrot.lane.b32.xlu0 %v781, 8
        %v845 = vpop.permute.xlu0 %844
        %846 = vrot.lane.b32.xlu0 %v784, 8
        %v847 = vpop.permute.xlu0 %846
        %848 = vrot.lane.b32.xlu0 %v786, 8
        %v849 = vpop.permute.xlu0 %848
        %850 = vrot.lane.b32.xlu0 %v788, 8
        %v851 = vpop.permute.xlu0 %850
        %852 = vrot.lane.b32.xlu0 %v789, 8
        %v853 = vpop.permute.xlu0 %852
        %854 = vrot.lane.b32.xlu0 %v792, 8
        %v855 = vpop.permute.xlu0 %854
        %856 = vrot.lane.b32.xlu0 %v794, 8
        %v857 = vpop.permute.xlu0 %856
        %858 = vrot.lane.b32.xlu0 %v796, 8
        %v859 = vpop.permute.xlu0 %858
        %860 = vrot.lane.b32.xlu0 %v797, 8
        %v861 = vpop.permute.xlu0 %860
        %vm894 = vcmask 1044480
        %v895 = vrot.slane %v291, 3
        %v896 = vrot.slane %v292, 3
        %v897 = vsel %vm894, %v895, %v896
        %v898 = vrot.slane %v293, 3
        %v899 = vsel %vm894, %v896, %v898
        %v900 = vrot.slane %v294, 3
        %v901 = vsel %vm894, %v898, %v900
        %v902 = vrot.slane 0.0, 3
        %v903 = vsel %vm894, %v900, %v902
        %v904 = vrot.slane %v323, 3
        %v905 = vrot.slane %v324, 3
        %v906 = vsel %vm894, %v904, %v905
        %v907 = vrot.slane %v325, 3
        %v908 = vsel %vm894, %v905, %v907
        %v909 = vrot.slane %v326, 3
        %v910 = vsel %vm894, %v907, %v909
        %v911 = vsel %vm894, %v909, %v902
        %v912 = vrot.slane %v355, 3
        %v913 = vrot.slane %v356, 3
        %v914 = vsel %vm894, %v912, %v913
        %v915 = vrot.slane %v357, 3
        %v916 = vsel %vm894, %v913, %v915
        %v917 = vrot.slane %v358, 3
        %v918 = vsel %vm894, %v915, %v917
        %v919 = vsel %vm894, %v917, %v902
        %v920 = vrot.slane %v387, 3
        %v921 = vrot.slane %v388, 3
        %v922 = vsel %vm894, %v920, %v921
        %v923 = vrot.slane %v389, 3
        %v924 = vsel %vm894, %v921, %v923
        %v925 = vrot.slane %v390, 3
        %v926 = vsel %vm894, %v923, %v925
        %v927 = vsel %vm894, %v925, %v902
        %v928 = vrot.slane %v419, 3
        %v929 = vrot.slane %v420, 3
        %v930 = vsel %vm894, %v928, %v929
        %v931 = vrot.slane %v421, 3
        %v932 = vsel %vm894, %v929, %v931
        %v933 = vrot.slane %v422, 3
        %v934 = vsel %vm894, %v931, %v933
        %v935 = vsel %vm894, %v933, %v902
        %v936 = vrot.slane %v451, 3
        %v937 = vrot.slane %v452, 3
        %v938 = vsel %vm894, %v936, %v937
        %v939 = vrot.slane %v453, 3
        %v940 = vsel %vm894, %v937, %v939
        %v941 = vrot.slane %v454, 3
        %v942 = vsel %vm894, %v939, %v941
        %v943 = vsel %vm894, %v941, %v902
        %v944 = vrot.slane %v483, 3
        %v945 = vrot.slane %v484, 3
        %v946 = vsel %vm894, %v944, %v945
        %v947 = vrot.slane %v485, 3
        %v948 = vsel %vm894, %v945, %v947
        %v949 = vrot.slane %v486, 3
        %v950 = vsel %vm894, %v947, %v949
        %v951 = vsel %vm894, %v949, %v902
        %v952 = vrot.slane %v515, 3
        %v953 = vrot.slane %v516, 3
        %v954 = vsel %vm894, %v952, %v953
        %v955 = vrot.slane %v517, 3
        %v956 = vsel %vm894, %v953, %v955
        %v957 = vrot.slane %v518, 3
        %v958 = vsel %vm894, %v955, %v957
        %v959 = vsel %vm894, %v957, %v902
        %960 = vrot.lane.b32.xlu0 %v897, 12
        %v961 = vpop.permute.xlu0 %960
        %962 = vrot.lane.b32.xlu0 %v899, 12
        %v963 = vpop.permute.xlu0 %962
        %964 = vrot.lane.b32.xlu0 %v901, 12
        %v965 = vpop.permute.xlu0 %964
        %966 = vrot.lane.b32.xlu0 %v903, 12
        %v967 = vpop.permute.xlu0 %966
        %968 = vrot.lane.b32.xlu0 %v906, 12
        %v969 = vpop.permute.xlu0 %968
        %970 = vrot.lane.b32.xlu0 %v908, 12
        %v971 = vpop.permute.xlu0 %970
        %972 = vrot.lane.b32.xlu0 %v910, 12
        %v973 = vpop.permute.xlu0 %972
        %974 = vrot.lane.b32.xlu0 %v911, 12
        %v975 = vpop.permute.xlu0 %974
        %976 = vrot.lane.b32.xlu0 %v914, 12
        %v977 = vpop.permute.xlu0 %976
        %978 = vrot.lane.b32.xlu0 %v916, 12
        %v979 = vpop.permute.xlu0 %978
        %980 = vrot.lane.b32.xlu0 %v918, 12
        %v981 = vpop.permute.xlu0 %980
        %982 = vrot.lane.b32.xlu0 %v919, 12
        %v983 = vpop.permute.xlu0 %982
        %984 = vrot.lane.b32.xlu0 %v922, 12
        %v985 = vpop.permute.xlu0 %984
        %986 = vrot.lane.b32.xlu0 %v924, 12
        %v987 = vpop.permute.xlu0 %986
        %988 = vrot.lane.b32.xlu0 %v926, 12
        %v989 = vpop.permute.xlu0 %988
        %990 = vrot.lane.b32.xlu0 %v927, 12
        %v991 = vpop.permute.xlu0 %990
        %992 = vrot.lane.b32.xlu0 %v930, 12
        %v993 = vpop.permute.xlu0 %992
        %994 = vrot.lane.b32.xlu0 %v932, 12
        %v995 = vpop.permute.xlu0 %994
        %996 = vrot.lane.b32.xlu0 %v934, 12
        %v997 = vpop.permute.xlu0 %996
        %998 = vrot.lane.b32.xlu0 %v935, 12
        %v999 = vpop.permute.xlu0 %998
        %1000 = vrot.lane.b32.xlu0 %v938, 12
        %v1001 = vpop.permute.xlu0 %1000
        %1002 = vrot.lane.b32.xlu0 %v940, 12
        %v1003 = vpop.permute.xlu0 %1002
        %1004 = vrot.lane.b32.xlu0 %v942, 12
        %v1005 = vpop.permute.xlu0 %1004
        %1006 = vrot.lane.b32.xlu0 %v943, 12
        %v1007 = vpop.permute.xlu0 %1006
        %1008 = vrot.lane.b32.xlu0 %v946, 12
        %v1009 = vpop.permute.xlu0 %1008
        %1010 = vrot.lane.b32.xlu0 %v948, 12
        %v1011 = vpop.permute.xlu0 %1010
        %1012 = vrot.lane.b32.xlu0 %v950, 12
        %v1013 = vpop.permute.xlu0 %1012
        %1014 = vrot.lane.b32.xlu0 %v951, 12
        %v1015 = vpop.permute.xlu0 %1014
        %1016 = vrot.lane.b32.xlu0 %v954, 12
        %v1017 = vpop.permute.xlu0 %1016
        %1018 = vrot.lane.b32.xlu0 %v956, 12
        %v1019 = vpop.permute.xlu0 %1018
        %1020 = vrot.lane.b32.xlu0 %v958, 12
        %v1021 = vpop.permute.xlu0 %1020
        %1022 = vrot.lane.b32.xlu0 %v959, 12
        %v1023 = vpop.permute.xlu0 %1022
        %vm1056 = vcmask 1043456
        %v1057 = vrot.slane %v291, 4
        %v1058 = vrot.slane %v292, 4
        %v1059 = vsel %vm1056, %v1057, %v1058
        %v1060 = vrot.slane %v293, 4
        %v1061 = vsel %vm1056, %v1058, %v1060
        %v1062 = vrot.slane %v294, 4
        %v1063 = vsel %vm1056, %v1060, %v1062
        %v1064 = vrot.slane 0.0, 4
        %v1065 = vsel %vm1056, %v1062, %v1064
        %v1066 = vrot.slane %v323, 4
        %v1067 = vrot.slane %v324, 4
        %v1068 = vsel %vm1056, %v1066, %v1067
        %v1069 = vrot.slane %v325, 4
        %v1070 = vsel %vm1056, %v1067, %v1069
        %v1071 = vrot.slane %v326, 4
        %v1072 = vsel %vm1056, %v1069, %v1071
        %v1073 = vsel %vm1056, %v1071, %v1064
        %v1074 = vrot.slane %v355, 4
        %v1075 = vrot.slane %v356, 4
        %v1076 = vsel %vm1056, %v1074, %v1075
        %v1077 = vrot.slane %v357, 4
        %v1078 = vsel %vm1056, %v1075, %v1077
        %v1079 = vrot.slane %v358, 4
        %v1080 = vsel %vm1056, %v1077, %v1079
        %v1081 = vsel %vm1056, %v1079, %v1064
        %v1082 = vrot.slane %v387, 4
        %v1083 = vrot.slane %v388, 4
        %v1084 = vsel %vm1056, %v1082, %v1083
        %v1085 = vrot.slane %v389, 4
        %v1086 = vsel %vm1056, %v1083, %v1085
        %v1087 = vrot.slane %v390, 4
        %v1088 = vsel %vm1056, %v1085, %v1087
        %v1089 = vsel %vm1056, %v1087, %v1064
        %v1090 = vrot.slane %v419, 4
        %v1091 = vrot.slane %v420, 4
        %v1092 = vsel %vm1056, %v1090, %v1091
        %v1093 = vrot.slane %v421, 4
        %v1094 = vsel %vm1056, %v1091, %v1093
        %v1095 = vrot.slane %v422, 4
        %v1096 = vsel %vm1056, %v1093, %v1095
        %v1097 = vsel %vm1056, %v1095, %v1064
        %v1098 = vrot.slane %v451, 4
        %v1099 = vrot.slane %v452, 4
        %v1100 = vsel %vm1056, %v1098, %v1099
        %v1101 = vrot.slane %v453, 4
        %v1102 = vsel %vm1056, %v1099, %v1101
        %v1103 = vrot.slane %v454, 4
        %v1104 = vsel %vm1056, %v1101, %v1103
        %v1105 = vsel %vm1056, %v1103, %v1064
        %v1106 = vrot.slane %v483, 4
        %v1107 = vrot.slane %v484, 4
        %v1108 = vsel %vm1056, %v1106, %v1107
        %v1109 = vrot.slane %v485, 4
        %v1110 = vsel %vm1056, %v1107, %v1109
        %v1111 = vrot.slane %v486, 4
        %v1112 = vsel %vm1056, %v1109, %v1111
        %v1113 = vsel %vm1056, %v1111, %v1064
        %v1114 = vrot.slane %v515, 4
        %v1115 = vrot.slane %v516, 4
        %v1116 = vsel %vm1056, %v1114, %v1115
        %v1117 = vrot.slane %v517, 4
        %v1118 = vsel %vm1056, %v1115, %v1117
        %v1119 = vrot.slane %v518, 4
        %v1120 = vsel %vm1056, %v1117, %v1119
        %v1121 = vsel %vm1056, %v1119, %v1064
        %1122 = vrot.lane.b32.xlu0 %v1059, 16
        %v1123 = vpop.permute.xlu0 %1122
        %1124 = vrot.lane.b32.xlu0 %v1061, 16
        %v1125 = vpop.permute.xlu0 %1124
        %1126 = vrot.lane.b32.xlu0 %v1063, 16
        %v1127 = vpop.permute.xlu0 %1126
        %1128 = vrot.lane.b32.xlu0 %v1065, 16
        %v1129 = vpop.permute.xlu0 %1128
        %1130 = vrot.lane.b32.xlu0 %v1068, 16
        %v1131 = vpop.permute.xlu0 %1130
        %1132 = vrot.lane.b32.xlu0 %v1070, 16
        %v1133 = vpop.permute.xlu0 %1132
        %1134 = vrot.lane.b32.xlu0 %v1072, 16
        %v1135 = vpop.permute.xlu0 %1134
        %1136 = vrot.lane.b32.xlu0 %v1073, 16
        %v1137 = vpop.permute.xlu0 %1136
        %1138 = vrot.lane.b32.xlu0 %v1076, 16
        %v1139 = vpop.permute.xlu0 %1138
        %1140 = vrot.lane.b32.xlu0 %v1078, 16
        %v1141 = vpop.permute.xlu0 %1140
        %1142 = vrot.lane.b32.xlu0 %v1080, 16
        %v1143 = vpop.permute.xlu0 %1142
        %1144 = vrot.lane.b32.xlu0 %v1081, 16
        %v1145 = vpop.permute.xlu0 %1144
        %1146 = vrot.lane.b32.xlu0 %v1084, 16
        %v1147 = vpop.permute.xlu0 %1146
        %1148 = vrot.lane.b32.xlu0 %v1086, 16
        %v1149 = vpop.permute.xlu0 %1148
        %1150 = vrot.lane.b32.xlu0 %v1088, 16
        %v1151 = vpop.permute.xlu0 %1150
        %1152 = vrot.lane.b32.xlu0 %v1089, 16
        %v1153 = vpop.permute.xlu0 %1152
        %1154 = vrot.lane.b32.xlu0 %v1092, 16
        %v1155 = vpop.permute.xlu0 %1154
        %1156 = vrot.lane.b32.xlu0 %v1094, 16
        %v1157 = vpop.permute.xlu0 %1156
        %1158 = vrot.lane.b32.xlu0 %v1096, 16
        %v1159 = vpop.permute.xlu0 %1158
        %1160 = vrot.lane.b32.xlu0 %v1097, 16
        %v1161 = vpop.permute.xlu0 %1160
        %1162 = vrot.lane.b32.xlu0 %v1100, 16
        %v1163 = vpop.permute.xlu0 %1162
        %1164 = vrot.lane.b32.xlu0 %v1102, 16
        %v1165 = vpop.permute.xlu0 %1164
        %1166 = vrot.lane.b32.xlu0 %v1104, 16
        %v1167 = vpop.permute.xlu0 %1166
        %1168 = vrot.lane.b32.xlu0 %v1105, 16
        %v1169 = vpop.permute.xlu0 %1168
        %1170 = vrot.lane.b32.xlu0 %v1108, 16
        %v1171 = vpop.permute.xlu0 %1170
        %1172 = vrot.lane.b32.xlu0 %v1110, 16
        %v1173 = vpop.permute.xlu0 %1172
        %1174 = vrot.lane.b32.xlu0 %v1112, 16
        %v1175 = vpop.permute.xlu0 %1174
        %1176 = vrot.lane.b32.xlu0 %v1113, 16
        %v1177 = vpop.permute.xlu0 %1176
        %1178 = vrot.lane.b32.xlu0 %v1116, 16
        %v1179 = vpop.permute.xlu0 %1178
        %1180 = vrot.lane.b32.xlu0 %v1118, 16
        %v1181 = vpop.permute.xlu0 %1180
        %1182 = vrot.lane.b32.xlu0 %v1120, 16
        %v1183 = vpop.permute.xlu0 %1182
        %1184 = vrot.lane.b32.xlu0 %v1121, 16
        %v1185 = vpop.permute.xlu0 %1184
        %vm1218 = vcmask 1042432
        %v1219 = vrot.slane %v291, 5
        %v1220 = vrot.slane %v292, 5
        %v1221 = vsel %vm1218, %v1219, %v1220
        %v1222 = vrot.slane %v293, 5
        %v1223 = vsel %vm1218, %v1220, %v1222
        %v1224 = vrot.slane %v294, 5
        %v1225 = vsel %vm1218, %v1222, %v1224
        %v1226 = vrot.slane 0.0, 5
        %v1227 = vsel %vm1218, %v1224, %v1226
        %v1228 = vrot.slane %v323, 5
        %v1229 = vrot.slane %v324, 5
        %v1230 = vsel %vm1218, %v1228, %v1229
        %v1231 = vrot.slane %v325, 5
        %v1232 = vsel %vm1218, %v1229, %v1231
        %v1233 = vrot.slane %v326, 5
        %v1234 = vsel %vm1218, %v1231, %v1233
        %v1235 = vsel %vm1218, %v1233, %v1226
        %v1236 = vrot.slane %v355, 5
        %v1237 = vrot.slane %v356, 5
        %v1238 = vsel %vm1218, %v1236, %v1237
        %v1239 = vrot.slane %v357, 5
        %v1240 = vsel %vm1218, %v1237, %v1239
        %v1241 = vrot.slane %v358, 5
        %v1242 = vsel %vm1218, %v1239, %v1241
        %v1243 = vsel %vm1218, %v1241, %v1226
        %v1244 = vrot.slane %v387, 5
        %v1245 = vrot.slane %v388, 5
        %v1246 = vsel %vm1218, %v1244, %v1245
        %v1247 = vrot.slane %v389, 5
        %v1248 = vsel %vm1218, %v1245, %v1247
        %v1249 = vrot.slane %v390, 5
        %v1250 = vsel %vm1218, %v1247, %v1249
        %v1251 = vsel %vm1218, %v1249, %v1226
        %v1252 = vrot.slane %v419, 5
        %v1253 = vrot.slane %v420, 5
        %v1254 = vsel %vm1218, %v1252, %v1253
        %v1255 = vrot.slane %v421, 5
        %v1256 = vsel %vm1218, %v1253, %v1255
        %v1257 = vrot.slane %v422, 5
        %v1258 = vsel %vm1218, %v1255, %v1257
        %v1259 = vsel %vm1218, %v1257, %v1226
        %v1260 = vrot.slane %v451, 5
        %v1261 = vrot.slane %v452, 5
        %v1262 = vsel %vm1218, %v1260, %v1261
        %v1263 = vrot.slane %v453, 5
        %v1264 = vsel %vm1218, %v1261, %v1263
        %v1265 = vrot.slane %v454, 5
        %v1266 = vsel %vm1218, %v1263, %v1265
        %v1267 = vsel %vm1218, %v1265, %v1226
        %v1268 = vrot.slane %v483, 5
        %v1269 = vrot.slane %v484, 5
        %v1270 = vsel %vm1218, %v1268, %v1269
        %v1271 = vrot.slane %v485, 5
        %v1272 = vsel %vm1218, %v1269, %v1271
        %v1273 = vrot.slane %v486, 5
        %v1274 = vsel %vm1218, %v1271, %v1273
        %v1275 = vsel %vm1218, %v1273, %v1226
        %v1276 = vrot.slane %v515, 5
        %v1277 = vrot.slane %v516, 5
        %v1278 = vsel %vm1218, %v1276, %v1277
        %v1279 = vrot.slane %v517, 5
        %v1280 = vsel %vm1218, %v1277, %v1279
        %v1281 = vrot.slane %v518, 5
        %v1282 = vsel %vm1218, %v1279, %v1281
        %v1283 = vsel %vm1218, %v1281, %v1226
        %1284 = vrot.lane.b32.xlu0 %v1221, 20
        %v1285 = vpop.permute.xlu0 %1284
        %1286 = vrot.lane.b32.xlu0 %v1223, 20
        %v1287 = vpop.permute.xlu0 %1286
        %1288 = vrot.lane.b32.xlu0 %v1225, 20
        %v1289 = vpop.permute.xlu0 %1288
        %1290 = vrot.lane.b32.xlu0 %v1227, 20
        %v1291 = vpop.permute.xlu0 %1290
        %1292 = vrot.lane.b32.xlu0 %v1230, 20
        %v1293 = vpop.permute.xlu0 %1292
        %1294 = vrot.lane.b32.xlu0 %v1232, 20
        %v1295 = vpop.permute.xlu0 %1294
        %1296 = vrot.lane.b32.xlu0 %v1234, 20
        %v1297 = vpop.permute.xlu0 %1296
        %1298 = vrot.lane.b32.xlu0 %v1235, 20
        %v1299 = vpop.permute.xlu0 %1298
        %1300 = vrot.lane.b32.xlu0 %v1238, 20
        %v1301 = vpop.permute.xlu0 %1300
        %1302 = vrot.lane.b32.xlu0 %v1240, 20
        %v1303 = vpop.permute.xlu0 %1302
        %1304 = vrot.lane.b32.xlu0 %v1242, 20
        %v1305 = vpop.permute.xlu0 %1304
        %1306 = vrot.lane.b32.xlu0 %v1243, 20
        %v1307 = vpop.permute.xlu0 %1306
        %1308 = vrot.lane.b32.xlu0 %v1246, 20
        %v1309 = vpop.permute.xlu0 %1308
        %1310 = vrot.lane.b32.xlu0 %v1248, 20
        %v1311 = vpop.permute.xlu0 %1310
        %1312 = vrot.lane.b32.xlu0 %v1250, 20
        %v1313 = vpop.permute.xlu0 %1312
        %1314 = vrot.lane.b32.xlu0 %v1251, 20
        %v1315 = vpop.permute.xlu0 %1314
        %1316 = vrot.lane.b32.xlu0 %v1254, 20
        %v1317 = vpop.permute.xlu0 %1316
        %1318 = vrot.lane.b32.xlu0 %v1256, 20
        %v1319 = vpop.permute.xlu0 %1318
        %1320 = vrot.lane.b32.xlu0 %v1258, 20
        %v1321 = vpop.permute.xlu0 %1320
        %1322 = vrot.lane.b32.xlu0 %v1259, 20
        %v1323 = vpop.permute.xlu0 %1322
        %1324 = vrot.lane.b32.xlu0 %v1262, 20
        %v1325 = vpop.permute.xlu0 %1324
        %1326 = vrot.lane.b32.xlu0 %v1264, 20
        %v1327 = vpop.permute.xlu0 %1326
        %1328 = vrot.lane.b32.xlu0 %v1266, 20
        %v1329 = vpop.permute.xlu0 %1328
        %1330 = vrot.lane.b32.xlu0 %v1267, 20
        %v1331 = vpop.permute.xlu0 %1330
        %1332 = vrot.lane.b32.xlu0 %v1270, 20
        %v1333 = vpop.permute.xlu0 %1332
        %1334 = vrot.lane.b32.xlu0 %v1272, 20
        %v1335 = vpop.permute.xlu0 %1334
        %1336 = vrot.lane.b32.xlu0 %v1274, 20
        %v1337 = vpop.permute.xlu0 %1336
        %1338 = vrot.lane.b32.xlu0 %v1275, 20
        %v1339 = vpop.permute.xlu0 %1338
        %1340 = vrot.lane.b32.xlu0 %v1278, 20
        %v1341 = vpop.permute.xlu0 %1340
        %1342 = vrot.lane.b32.xlu0 %v1280, 20
        %v1343 = vpop.permute.xlu0 %1342
        %1344 = vrot.lane.b32.xlu0 %v1282, 20
        %v1345 = vpop.permute.xlu0 %1344
        %1346 = vrot.lane.b32.xlu0 %v1283, 20
        %v1347 = vpop.permute.xlu0 %1346
        %vm1380 = vcmask 1041408
        %v1381 = vrot.slane %v291, 6
        %v1382 = vrot.slane %v292, 6
        %v1383 = vsel %vm1380, %v1381, %v1382
        %v1384 = vrot.slane %v293, 6
        %v1385 = vsel %vm1380, %v1382, %v1384
        %v1386 = vrot.slane %v294, 6
        %v1387 = vsel %vm1380, %v1384, %v1386
        %v1388 = vrot.slane 0.0, 6
        %v1389 = vsel %vm1380, %v1386, %v1388
        %v1390 = vrot.slane %v323, 6
        %v1391 = vrot.slane %v324, 6
        %v1392 = vsel %vm1380, %v1390, %v1391
        %v1393 = vrot.slane %v325, 6
        %v1394 = vsel %vm1380, %v1391, %v1393
        %v1395 = vrot.slane %v326, 6
        %v1396 = vsel %vm1380, %v1393, %v1395
        %v1397 = vsel %vm1380, %v1395, %v1388
        %v1398 = vrot.slane %v355, 6
        %v1399 = vrot.slane %v356, 6
        %v1400 = vsel %vm1380, %v1398, %v1399
        %v1401 = vrot.slane %v357, 6
        %v1402 = vsel %vm1380, %v1399, %v1401
        %v1403 = vrot.slane %v358, 6
        %v1404 = vsel %vm1380, %v1401, %v1403
        %v1405 = vsel %vm1380, %v1403, %v1388
        %v1406 = vrot.slane %v387, 6
        %v1407 = vrot.slane %v388, 6
        %v1408 = vsel %vm1380, %v1406, %v1407
        %v1409 = vrot.slane %v389, 6
        %v1410 = vsel %vm1380, %v1407, %v1409
        %v1411 = vrot.slane %v390, 6
        %v1412 = vsel %vm1380, %v1409, %v1411
        %v1413 = vsel %vm1380, %v1411, %v1388
        %v1414 = vrot.slane %v419, 6
        %v1415 = vrot.slane %v420, 6
        %v1416 = vsel %vm1380, %v1414, %v1415
        %v1417 = vrot.slane %v421, 6
        %v1418 = vsel %vm1380, %v1415, %v1417
        %v1419 = vrot.slane %v422, 6
        %v1420 = vsel %vm1380, %v1417, %v1419
        %v1421 = vsel %vm1380, %v1419, %v1388
        %v1422 = vrot.slane %v451, 6
        %v1423 = vrot.slane %v452, 6
        %v1424 = vsel %vm1380, %v1422, %v1423
        %v1425 = vrot.slane %v453, 6
        %v1426 = vsel %vm1380, %v1423, %v1425
        %v1427 = vrot.slane %v454, 6
        %v1428 = vsel %vm1380, %v1425, %v1427
        %v1429 = vsel %vm1380, %v1427, %v1388
        %v1430 = vrot.slane %v483, 6
        %v1431 = vrot.slane %v484, 6
        %v1432 = vsel %vm1380, %v1430, %v1431
        %v1433 = vrot.slane %v485, 6
        %v1434 = vsel %vm1380, %v1431, %v1433
        %v1435 = vrot.slane %v486, 6
        %v1436 = vsel %vm1380, %v1433, %v1435
        %v1437 = vsel %vm1380, %v1435, %v1388
        %v1438 = vrot.slane %v515, 6
        %v1439 = vrot.slane %v516, 6
        %v1440 = vsel %vm1380, %v1438, %v1439
        %v1441 = vrot.slane %v517, 6
        %v1442 = vsel %vm1380, %v1439, %v1441
        %v1443 = vrot.slane %v518, 6
        %v1444 = vsel %vm1380, %v1441, %v1443
        %v1445 = vsel %vm1380, %v1443, %v1388
        %1446 = vrot.lane.b32.xlu0 %v1383, 24
        %v1447 = vpop.permute.xlu0 %1446
        %1448 = vrot.lane.b32.xlu0 %v1385, 24
        %v1449 = vpop.permute.xlu0 %1448
        %1450 = vrot.lane.b32.xlu0 %v1387, 24
        %v1451 = vpop.permute.xlu0 %1450
        %1452 = vrot.lane.b32.xlu0 %v1389, 24
        %v1453 = vpop.permute.xlu0 %1452
        %1454 = vrot.lane.b32.xlu0 %v1392, 24
        %v1455 = vpop.permute.xlu0 %1454
        %1456 = vrot.lane.b32.xlu0 %v1394, 24
        %v1457 = vpop.permute.xlu0 %1456
        %1458 = vrot.lane.b32.xlu0 %v1396, 24
        %v1459 = vpop.permute.xlu0 %1458
        %1460 = vrot.lane.b32.xlu0 %v1397, 24
        %v1461 = vpop.permute.xlu0 %1460
        %1462 = vrot.lane.b32.xlu0 %v1400, 24
        %v1463 = vpop.permute.xlu0 %1462
        %1464 = vrot.lane.b32.xlu0 %v1402, 24
        %v1465 = vpop.permute.xlu0 %1464
        %1466 = vrot.lane.b32.xlu0 %v1404, 24
        %v1467 = vpop.permute.xlu0 %1466
        %1468 = vrot.lane.b32.xlu0 %v1405, 24
        %v1469 = vpop.permute.xlu0 %1468
        %1470 = vrot.lane.b32.xlu0 %v1408, 24
        %v1471 = vpop.permute.xlu0 %1470
        %1472 = vrot.lane.b32.xlu0 %v1410, 24
        %v1473 = vpop.permute.xlu0 %1472
        %1474 = vrot.lane.b32.xlu0 %v1412, 24
        %v1475 = vpop.permute.xlu0 %1474
        %1476 = vrot.lane.b32.xlu0 %v1413, 24
        %v1477 = vpop.permute.xlu0 %1476
        %1478 = vrot.lane.b32.xlu0 %v1416, 24
        %v1479 = vpop.permute.xlu0 %1478
        %1480 = vrot.lane.b32.xlu0 %v1418, 24
        %v1481 = vpop.permute.xlu0 %1480
        %1482 = vrot.lane.b32.xlu0 %v1420, 24
        %v1483 = vpop.permute.xlu0 %1482
        %1484 = vrot.lane.b32.xlu0 %v1421, 24
        %v1485 = vpop.permute.xlu0 %1484
        %1486 = vrot.lane.b32.xlu0 %v1424, 24
        %v1487 = vpop.permute.xlu0 %1486
        %1488 = vrot.lane.b32.xlu0 %v1426, 24
        %v1489 = vpop.permute.xlu0 %1488
        %1490 = vrot.lane.b32.xlu0 %v1428, 24
        %v1491 = vpop.permute.xlu0 %1490
        %1492 = vrot.lane.b32.xlu0 %v1429, 24
        %v1493 = vpop.permute.xlu0 %1492
        %1494 = vrot.lane.b32.xlu0 %v1432, 24
        %v1495 = vpop.permute.xlu0 %1494
        %1496 = vrot.lane.b32.xlu0 %v1434, 24
        %v1497 = vpop.permute.xlu0 %1496
        %1498 = vrot.lane.b32.xlu0 %v1436, 24
        %v1499 = vpop.permute.xlu0 %1498
        %1500 = vrot.lane.b32.xlu0 %v1437, 24
        %v1501 = vpop.permute.xlu0 %1500
        %1502 = vrot.lane.b32.xlu0 %v1440, 24
        %v1503 = vpop.permute.xlu0 %1502
        %1504 = vrot.lane.b32.xlu0 %v1442, 24
        %v1505 = vpop.permute.xlu0 %1504
        %1506 = vrot.lane.b32.xlu0 %v1444, 24
        %v1507 = vpop.permute.xlu0 %1506
        %1508 = vrot.lane.b32.xlu0 %v1445, 24
        %v1509 = vpop.permute.xlu0 %1508
        %vm1542 = vcmask 1040384
        %v1543 = vrot.slane %v291, 7
        %v1544 = vrot.slane %v292, 7
        %v1545 = vsel %vm1542, %v1543, %v1544
        %v1546 = vrot.slane %v293, 7
        %v1547 = vsel %vm1542, %v1544, %v1546
        %v1548 = vrot.slane %v294, 7
        %v1549 = vsel %vm1542, %v1546, %v1548
        %v1550 = vrot.slane 0.0, 7
        %v1551 = vsel %vm1542, %v1548, %v1550
        %v1552 = vrot.slane %v323, 7
        %v1553 = vrot.slane %v324, 7
        %v1554 = vsel %vm1542, %v1552, %v1553
        %v1555 = vrot.slane %v325, 7
        %v1556 = vsel %vm1542, %v1553, %v1555
        %v1557 = vrot.slane %v326, 7
        %v1558 = vsel %vm1542, %v1555, %v1557
        %v1559 = vsel %vm1542, %v1557, %v1550
        %v1560 = vrot.slane %v355, 7
        %v1561 = vrot.slane %v356, 7
        %v1562 = vsel %vm1542, %v1560, %v1561
        %v1563 = vrot.slane %v357, 7
        %v1564 = vsel %vm1542, %v1561, %v1563
        %v1565 = vrot.slane %v358, 7
        %v1566 = vsel %vm1542, %v1563, %v1565
        %v1567 = vsel %vm1542, %v1565, %v1550
        %v1568 = vrot.slane %v387, 7
        %v1569 = vrot.slane %v388, 7
        %v1570 = vsel %vm1542, %v1568, %v1569
        %v1571 = vrot.slane %v389, 7
        %v1572 = vsel %vm1542, %v1569, %v1571
        %v1573 = vrot.slane %v390, 7
        %v1574 = vsel %vm1542, %v1571, %v1573
        %v1575 = vsel %vm1542, %v1573, %v1550
        %v1576 = vrot.slane %v419, 7
        %v1577 = vrot.slane %v420, 7
        %v1578 = vsel %vm1542, %v1576, %v1577
        %v1579 = vrot.slane %v421, 7
        %v1580 = vsel %vm1542, %v1577, %v1579
        %v1581 = vrot.slane %v422, 7
        %v1582 = vsel %vm1542, %v1579, %v1581
        %v1583 = vsel %vm1542, %v1581, %v1550
        %v1584 = vrot.slane %v451, 7
        %v1585 = vrot.slane %v452, 7
        %v1586 = vsel %vm1542, %v1584, %v1585
        %v1587 = vrot.slane %v453, 7
        %v1588 = vsel %vm1542, %v1585, %v1587
        %v1589 = vrot.slane %v454, 7
        %v1590 = vsel %vm1542, %v1587, %v1589
        %v1591 = vsel %vm1542, %v1589, %v1550
        %v1592 = vrot.slane %v483, 7
        %v1593 = vrot.slane %v484, 7
        %v1594 = vsel %vm1542, %v1592, %v1593
        %v1595 = vrot.slane %v485, 7
        %v1596 = vsel %vm1542, %v1593, %v1595
        %v1597 = vrot.slane %v486, 7
        %v1598 = vsel %vm1542, %v1595, %v1597
        %v1599 = vsel %vm1542, %v1597, %v1550
        %v1600 = vrot.slane %v515, 7
        %v1601 = vrot.slane %v516, 7
        %v1602 = vsel %vm1542, %v1600, %v1601
        %v1603 = vrot.slane %v517, 7
        %v1604 = vsel %vm1542, %v1601, %v1603
        %v1605 = vrot.slane %v518, 7
        %v1606 = vsel %vm1542, %v1603, %v1605
        %v1607 = vsel %vm1542, %v1605, %v1550
        %1608 = vrot.lane.b32.xlu0 %v1545, 28
        %v1609 = vpop.permute.xlu0 %1608
        %1610 = vrot.lane.b32.xlu0 %v1547, 28
        %v1611 = vpop.permute.xlu0 %1610
        %1612 = vrot.lane.b32.xlu0 %v1549, 28
        %v1613 = vpop.permute.xlu0 %1612
        %1614 = vrot.lane.b32.xlu0 %v1551, 28
        %v1615 = vpop.permute.xlu0 %1614
        %1616 = vrot.lane.b32.xlu0 %v1554, 28
        %v1617 = vpop.permute.xlu0 %1616
        %1618 = vrot.lane.b32.xlu0 %v1556, 28
        %v1619 = vpop.permute.xlu0 %1618
        %1620 = vrot.lane.b32.xlu0 %v1558, 28
        %v1621 = vpop.permute.xlu0 %1620
        %1622 = vrot.lane.b32.xlu0 %v1559, 28
        %v1623 = vpop.permute.xlu0 %1622
        %1624 = vrot.lane.b32.xlu0 %v1562, 28
        %v1625 = vpop.permute.xlu0 %1624
        %1626 = vrot.lane.b32.xlu0 %v1564, 28
        %v1627 = vpop.permute.xlu0 %1626
        %1628 = vrot.lane.b32.xlu0 %v1566, 28
        %v1629 = vpop.permute.xlu0 %1628
        %1630 = vrot.lane.b32.xlu0 %v1567, 28
        %v1631 = vpop.permute.xlu0 %1630
        %1632 = vrot.lane.b32.xlu0 %v1570, 28
        %v1633 = vpop.permute.xlu0 %1632
        %1634 = vrot.lane.b32.xlu0 %v1572, 28
        %v1635 = vpop.permute.xlu0 %1634
        %1636 = vrot.lane.b32.xlu0 %v1574, 28
        %v1637 = vpop.permute.xlu0 %1636
        %1638 = vrot.lane.b32.xlu0 %v1575, 28
        %v1639 = vpop.permute.xlu0 %1638
        %1640 = vrot.lane.b32.xlu0 %v1578, 28
        %v1641 = vpop.permute.xlu0 %1640
        %1642 = vrot.lane.b32.xlu0 %v1580, 28
        %v1643 = vpop.permute.xlu0 %1642
        %1644 = vrot.lane.b32.xlu0 %v1582, 28
        %v1645 = vpop.permute.xlu0 %1644
        %1646 = vrot.lane.b32.xlu0 %v1583, 28
        %v1647 = vpop.permute.xlu0 %1646
        %1648 = vrot.lane.b32.xlu0 %v1586, 28
        %v1649 = vpop.permute.xlu0 %1648
        %1650 = vrot.lane.b32.xlu0 %v1588, 28
        %v1651 = vpop.permute.xlu0 %1650
        %1652 = vrot.lane.b32.xlu0 %v1590, 28
        %v1653 = vpop.permute.xlu0 %1652
        %1654 = vrot.lane.b32.xlu0 %v1591, 28
        %v1655 = vpop.permute.xlu0 %1654
        %1656 = vrot.lane.b32.xlu0 %v1594, 28
        %v1657 = vpop.permute.xlu0 %1656
        %1658 = vrot.lane.b32.xlu0 %v1596, 28
        %v1659 = vpop.permute.xlu0 %1658
        %1660 = vrot.lane.b32.xlu0 %v1598, 28
        %v1661 = vpop.permute.xlu0 %1660
        %1662 = vrot.lane.b32.xlu0 %v1599, 28
        %v1663 = vpop.permute.xlu0 %1662
        %1664 = vrot.lane.b32.xlu0 %v1602, 28
        %v1665 = vpop.permute.xlu0 %1664
        %1666 = vrot.lane.b32.xlu0 %v1604, 28
        %v1667 = vpop.permute.xlu0 %1666
        %1668 = vrot.lane.b32.xlu0 %v1606, 28
        %v1669 = vpop.permute.xlu0 %1668
        %1670 = vrot.lane.b32.xlu0 %v1607, 28
        %v1671 = vpop.permute.xlu0 %1670
        %1704 = vrot.lane.b32.xlu0 %v292, 32
        %v1705 = vpop.permute.xlu0 %1704
        %1706 = vrot.lane.b32.xlu0 %v293, 32
        %v1707 = vpop.permute.xlu0 %1706
        %1708 = vrot.lane.b32.xlu0 %v294, 32
        %v1709 = vpop.permute.xlu0 %1708
        %1710 = vrot.lane.b32.xlu0 0.0, 32
        %v1711 = vpop.permute.xlu0 %1710
        %1712 = vrot.lane.b32.xlu0 %v324, 32
        %v1713 = vpop.permute.xlu0 %1712
        %1714 = vrot.lane.b32.xlu0 %v325, 32
        %v1715 = vpop.permute.xlu0 %1714
        %1716 = vrot.lane.b32.xlu0 %v326, 32
        %v1717 = vpop.permute.xlu0 %1716
        %1718 = vrot.lane.b32.xlu0 %v356, 32
        %v1719 = vpop.permute.xlu0 %1718
        %1720 = vrot.lane.b32.xlu0 %v357, 32
        %v1721 = vpop.permute.xlu0 %1720
        %1722 = vrot.lane.b32.xlu0 %v358, 32
        %v1723 = vpop.permute.xlu0 %1722
        %1724 = vrot.lane.b32.xlu0 %v388, 32
        %v1725 = vpop.permute.xlu0 %1724
        %1726 = vrot.lane.b32.xlu0 %v389, 32
        %v1727 = vpop.permute.xlu0 %1726
        %1728 = vrot.lane.b32.xlu0 %v390, 32
        %v1729 = vpop.permute.xlu0 %1728
        %1730 = vrot.lane.b32.xlu0 %v420, 32
        %v1731 = vpop.permute.xlu0 %1730
        %1732 = vrot.lane.b32.xlu0 %v421, 32
        %v1733 = vpop.permute.xlu0 %1732
        %1734 = vrot.lane.b32.xlu0 %v422, 32
        %v1735 = vpop.permute.xlu0 %1734
        %1736 = vrot.lane.b32.xlu0 %v452, 32
        %v1737 = vpop.permute.xlu0 %1736
        %1738 = vrot.lane.b32.xlu0 %v453, 32
        %v1739 = vpop.permute.xlu0 %1738
        %1740 = vrot.lane.b32.xlu0 %v454, 32
        %v1741 = vpop.permute.xlu0 %1740
        %1742 = vrot.lane.b32.xlu0 %v484, 32
        %v1743 = vpop.permute.xlu0 %1742
        %1744 = vrot.lane.b32.xlu0 %v485, 32
        %v1745 = vpop.permute.xlu0 %1744
        %1746 = vrot.lane.b32.xlu0 %v486, 32
        %v1747 = vpop.permute.xlu0 %1746
        %1748 = vrot.lane.b32.xlu0 %v516, 32
        %v1749 = vpop.permute.xlu0 %1748
        %1750 = vrot.lane.b32.xlu0 %v517, 32
        %v1751 = vpop.permute.xlu0 %1750
        %1752 = vrot.lane.b32.xlu0 %v518, 32
        %v1753 = vpop.permute.xlu0 %1752
        %v1779 = vsel %vm570, %v578, %v578
        %1780 = vrot.lane.b32.xlu0 %v575, 36
        %v1781 = vpop.permute.xlu0 %1780
        %1782 = vrot.lane.b32.xlu0 %v577, 36
        %v1783 = vpop.permute.xlu0 %1782
        %1784 = vrot.lane.b32.xlu0 %v579, 36
        %v1785 = vpop.permute.xlu0 %1784
        %1786 = vrot.lane.b32.xlu0 %v1779, 36
        %v1787 = vpop.permute.xlu0 %1786
        %1788 = vrot.lane.b32.xlu0 %v584, 36
        %v1789 = vpop.permute.xlu0 %1788
        %1790 = vrot.lane.b32.xlu0 %v586, 36
        %v1791 = vpop.permute.xlu0 %1790
        %1792 = vrot.lane.b32.xlu0 %v587, 36
        %v1793 = vpop.permute.xlu0 %1792
        %1794 = vrot.lane.b32.xlu0 %v592, 36
        %v1795 = vpop.permute.xlu0 %1794
        %1796 = vrot.lane.b32.xlu0 %v594, 36
        %v1797 = vpop.permute.xlu0 %1796
        %1798 = vrot.lane.b32.xlu0 %v595, 36
        %v1799 = vpop.permute.xlu0 %1798
        %1800 = vrot.lane.b32.xlu0 %v600, 36
        %v1801 = vpop.permute.xlu0 %1800
        %1802 = vrot.lane.b32.xlu0 %v602, 36
        %v1803 = vpop.permute.xlu0 %1802
        %1804 = vrot.lane.b32.xlu0 %v603, 36
        %v1805 = vpop.permute.xlu0 %1804
        %1806 = vrot.lane.b32.xlu0 %v608, 36
        %v1807 = vpop.permute.xlu0 %1806
        %1808 = vrot.lane.b32.xlu0 %v610, 36
        %v1809 = vpop.permute.xlu0 %1808
        %1810 = vrot.lane.b32.xlu0 %v611, 36
        %v1811 = vpop.permute.xlu0 %1810
        %1812 = vrot.lane.b32.xlu0 %v616, 36
        %v1813 = vpop.permute.xlu0 %1812
        %1814 = vrot.lane.b32.xlu0 %v618, 36
        %v1815 = vpop.permute.xlu0 %1814
        %1816 = vrot.lane.b32.xlu0 %v619, 36
        %v1817 = vpop.permute.xlu0 %1816
        %1818 = vrot.lane.b32.xlu0 %v624, 36
        %v1819 = vpop.permute.xlu0 %1818
        %1820 = vrot.lane.b32.xlu0 %v626, 36
        %v1821 = vpop.permute.xlu0 %1820
        %1822 = vrot.lane.b32.xlu0 %v627, 36
        %v1823 = vpop.permute.xlu0 %1822
        %1824 = vrot.lane.b32.xlu0 %v632, 36
        %v1825 = vpop.permute.xlu0 %1824
        %1826 = vrot.lane.b32.xlu0 %v634, 36
        %v1827 = vpop.permute.xlu0 %1826
        %1828 = vrot.lane.b32.xlu0 %v635, 36
        %v1829 = vpop.permute.xlu0 %1828
        %v1855 = vsel %vm732, %v740, %v740
        %1856 = vrot.lane.b32.xlu0 %v737, 40
        %v1857 = vpop.permute.xlu0 %1856
        %1858 = vrot.lane.b32.xlu0 %v739, 40
        %v1859 = vpop.permute.xlu0 %1858
        %1860 = vrot.lane.b32.xlu0 %v741, 40
        %v1861 = vpop.permute.xlu0 %1860
        %1862 = vrot.lane.b32.xlu0 %v1855, 40
        %v1863 = vpop.permute.xlu0 %1862
        %1864 = vrot.lane.b32.xlu0 %v746, 40
        %v1865 = vpop.permute.xlu0 %1864
        %1866 = vrot.lane.b32.xlu0 %v748, 40
        %v1867 = vpop.permute.xlu0 %1866
        %1868 = vrot.lane.b32.xlu0 %v749, 40
        %v1869 = vpop.permute.xlu0 %1868
        %1870 = vrot.lane.b32.xlu0 %v754, 40
        %v1871 = vpop.permute.xlu0 %1870
        %1872 = vrot.lane.b32.xlu0 %v756, 40
        %v1873 = vpop.permute.xlu0 %1872
        %1874 = vrot.lane.b32.xlu0 %v757, 40
        %v1875 = vpop.permute.xlu0 %1874
        %1876 = vrot.lane.b32.xlu0 %v762, 40
        %v1877 = vpop.permute.xlu0 %1876
        %1878 = vrot.lane.b32.xlu0 %v764, 40
        %v1879 = vpop.permute.xlu0 %1878
        %1880 = vrot.lane.b32.xlu0 %v765, 40
        %v1881 = vpop.permute.xlu0 %1880
        %1882 = vrot.lane.b32.xlu0 %v770, 40
        %v1883 = vpop.permute.xlu0 %1882
        %1884 = vrot.lane.b32.xlu0 %v772, 40
        %v1885 = vpop.permute.xlu0 %1884
        %1886 = vrot.lane.b32.xlu0 %v773, 40
        %v1887 = vpop.permute.xlu0 %1886
        %1888 = vrot.lane.b32.xlu0 %v778, 40
        %v1889 = vpop.permute.xlu0 %1888
        %1890 = vrot.lane.b32.xlu0 %v780, 40
        %v1891 = vpop.permute.xlu0 %1890
        %1892 = vrot.lane.b32.xlu0 %v781, 40
        %v1893 = vpop.permute.xlu0 %1892
        %1894 = vrot.lane.b32.xlu0 %v786, 40
        %v1895 = vpop.permute.xlu0 %1894
        %1896 = vrot.lane.b32.xlu0 %v788, 40
        %v1897 = vpop.permute.xlu0 %1896
        %1898 = vrot.lane.b32.xlu0 %v789, 40
        %v1899 = vpop.permute.xlu0 %1898
        %1900 = vrot.lane.b32.xlu0 %v794, 40
        %v1901 = vpop.permute.xlu0 %1900
        %1902 = vrot.lane.b32.xlu0 %v796, 40
        %v1903 = vpop.permute.xlu0 %1902
        %1904 = vrot.lane.b32.xlu0 %v797, 40
        %v1905 = vpop.permute.xlu0 %1904
        %v1931 = vsel %vm894, %v902, %v902
        %1932 = vrot.lane.b32.xlu0 %v899, 44
        %v1933 = vpop.permute.xlu0 %1932
        %1934 = vrot.lane.b32.xlu0 %v901, 44
        %v1935 = vpop.permute.xlu0 %1934
        %1936 = vrot.lane.b32.xlu0 %v903, 44
        %v1937 = vpop.permute.xlu0 %1936
        %1938 = vrot.lane.b32.xlu0 %v1931, 44
        %v1939 = vpop.permute.xlu0 %1938
        %1940 = vrot.lane.b32.xlu0 %v908, 44
        %v1941 = vpop.permute.xlu0 %1940
        %1942 = vrot.lane.b32.xlu0 %v910, 44
        %v1943 = vpop.permute.xlu0 %1942
        %1944 = vrot.lane.b32.xlu0 %v911, 44
        %v1945 = vpop.permute.xlu0 %1944
        %1946 = vrot.lane.b32.xlu0 %v916, 44
        %v1947 = vpop.permute.xlu0 %1946
        %1948 = vrot.lane.b32.xlu0 %v918, 44
        %v1949 = vpop.permute.xlu0 %1948
        %1950 = vrot.lane.b32.xlu0 %v919, 44
        %v1951 = vpop.permute.xlu0 %1950
        %1952 = vrot.lane.b32.xlu0 %v924, 44
        %v1953 = vpop.permute.xlu0 %1952
        %1954 = vrot.lane.b32.xlu0 %v926, 44
        %v1955 = vpop.permute.xlu0 %1954
        %1956 = vrot.lane.b32.xlu0 %v927, 44
        %v1957 = vpop.permute.xlu0 %1956
        %1958 = vrot.lane.b32.xlu0 %v932, 44
        %v1959 = vpop.permute.xlu0 %1958
        %1960 = vrot.lane.b32.xlu0 %v934, 44
        %v1961 = vpop.permute.xlu0 %1960
        %1962 = vrot.lane.b32.xlu0 %v935, 44
        %v1963 = vpop.permute.xlu0 %1962
        %1964 = vrot.lane.b32.xlu0 %v940, 44
        %v1965 = vpop.permute.xlu0 %1964
        %1966 = vrot.lane.b32.xlu0 %v942, 44
        %v1967 = vpop.permute.xlu0 %1966
        %1968 = vrot.lane.b32.xlu0 %v943, 44
        %v1969 = vpop.permute.xlu0 %1968
        %1970 = vrot.lane.b32.xlu0 %v948, 44
        %v1971 = vpop.permute.xlu0 %1970
        %1972 = vrot.lane.b32.xlu0 %v950, 44
        %v1973 = vpop.permute.xlu0 %1972
        %1974 = vrot.lane.b32.xlu0 %v951, 44
        %v1975 = vpop.permute.xlu0 %1974
        %1976 = vrot.lane.b32.xlu0 %v956, 44
        %v1977 = vpop.permute.xlu0 %1976
        %1978 = vrot.lane.b32.xlu0 %v958, 44
        %v1979 = vpop.permute.xlu0 %1978
        %1980 = vrot.lane.b32.xlu0 %v959, 44
        %v1981 = vpop.permute.xlu0 %1980
        %v2007 = vsel %vm1056, %v1064, %v1064
        %2008 = vrot.lane.b32.xlu0 %v1061, 48
        %v2009 = vpop.permute.xlu0 %2008
        %2010 = vrot.lane.b32.xlu0 %v1063, 48
        %v2011 = vpop.permute.xlu0 %2010
        %2012 = vrot.lane.b32.xlu0 %v1065, 48
        %v2013 = vpop.permute.xlu0 %2012
        %2014 = vrot.lane.b32.xlu0 %v2007, 48
        %v2015 = vpop.permute.xlu0 %2014
        %2016 = vrot.lane.b32.xlu0 %v1070, 48
        %v2017 = vpop.permute.xlu0 %2016
        %2018 = vrot.lane.b32.xlu0 %v1072, 48
        %v2019 = vpop.permute.xlu0 %2018
        %2020 = vrot.lane.b32.xlu0 %v1073, 48
        %v2021 = vpop.permute.xlu0 %2020
        %2022 = vrot.lane.b32.xlu0 %v1078, 48
        %v2023 = vpop.permute.xlu0 %2022
        %2024 = vrot.lane.b32.xlu0 %v1080, 48
        %v2025 = vpop.permute.xlu0 %2024
        %2026 = vrot.lane.b32.xlu0 %v1081, 48
        %v2027 = vpop.permute.xlu0 %2026
        %2028 = vrot.lane.b32.xlu0 %v1086, 48
        %v2029 = vpop.permute.xlu0 %2028
        %2030 = vrot.lane.b32.xlu0 %v1088, 48
        %v2031 = vpop.permute.xlu0 %2030
        %2032 = vrot.lane.b32.xlu0 %v1089, 48
        %v2033 = vpop.permute.xlu0 %2032
        %2034 = vrot.lane.b32.xlu0 %v1094, 48
        %v2035 = vpop.permute.xlu0 %2034
        %2036 = vrot.lane.b32.xlu0 %v1096, 48
        %v2037 = vpop.permute.xlu0 %2036
        %2038 = vrot.lane.b32.xlu0 %v1097, 48
        %v2039 = vpop.permute.xlu0 %2038
        %2040 = vrot.lane.b32.xlu0 %v1102, 48
        %v2041 = vpop.permute.xlu0 %2040
        %2042 = vrot.lane.b32.xlu0 %v1104, 48
        %v2043 = vpop.permute.xlu0 %2042
        %2044 = vrot.lane.b32.xlu0 %v1105, 48
        %v2045 = vpop.permute.xlu0 %2044
        %2046 = vrot.lane.b32.xlu0 %v1110, 48
        %v2047 = vpop.permute.xlu0 %2046
        %2048 = vrot.lane.b32.xlu0 %v1112, 48
        %v2049 = vpop.permute.xlu0 %2048
        %2050 = vrot.lane.b32.xlu0 %v1113, 48
        %v2051 = vpop.permute.xlu0 %2050
        %2052 = vrot.lane.b32.xlu0 %v1118, 48
        %v2053 = vpop.permute.xlu0 %2052
        %2054 = vrot.lane.b32.xlu0 %v1120, 48
        %v2055 = vpop.permute.xlu0 %2054
        %2056 = vrot.lane.b32.xlu0 %v1121, 48
        %v2057 = vpop.permute.xlu0 %2056
        %v2083 = vsel %vm1218, %v1226, %v1226
        %2084 = vrot.lane.b32.xlu0 %v1223, 52
        %v2085 = vpop.permute.xlu0 %2084
        %2086 = vrot.lane.b32.xlu0 %v1225, 52
        %v2087 = vpop.permute.xlu0 %2086
        %2088 = vrot.lane.b32.xlu0 %v1227, 52
        %v2089 = vpop.permute.xlu0 %2088
        %2090 = vrot.lane.b32.xlu0 %v2083, 52
        %v2091 = vpop.permute.xlu0 %2090
        %2092 = vrot.lane.b32.xlu0 %v1232, 52
        %v2093 = vpop.permute.xlu0 %2092
        %2094 = vrot.lane.b32.xlu0 %v1234, 52
        %v2095 = vpop.permute.xlu0 %2094
        %2096 = vrot.lane.b32.xlu0 %v1235, 52
        %v2097 = vpop.permute.xlu0 %2096
        %2098 = vrot.lane.b32.xlu0 %v1240, 52
        %v2099 = vpop.permute.xlu0 %2098
        %2100 = vrot.lane.b32.xlu0 %v1242, 52
        %v2101 = vpop.permute.xlu0 %2100
        %2102 = vrot.lane.b32.xlu0 %v1243, 52
        %v2103 = vpop.permute.xlu0 %2102
        %2104 = vrot.lane.b32.xlu0 %v1248, 52
        %v2105 = vpop.permute.xlu0 %2104
        %2106 = vrot.lane.b32.xlu0 %v1250, 52
        %v2107 = vpop.permute.xlu0 %2106
        %2108 = vrot.lane.b32.xlu0 %v1251, 52
        %v2109 = vpop.permute.xlu0 %2108
        %2110 = vrot.lane.b32.xlu0 %v1256, 52
        %v2111 = vpop.permute.xlu0 %2110
        %2112 = vrot.lane.b32.xlu0 %v1258, 52
        %v2113 = vpop.permute.xlu0 %2112
        %2114 = vrot.lane.b32.xlu0 %v1259, 52
        %v2115 = vpop.permute.xlu0 %2114
        %2116 = vrot.lane.b32.xlu0 %v1264, 52
        %v2117 = vpop.permute.xlu0 %2116
        %2118 = vrot.lane.b32.xlu0 %v1266, 52
        %v2119 = vpop.permute.xlu0 %2118
        %2120 = vrot.lane.b32.xlu0 %v1267, 52
        %v2121 = vpop.permute.xlu0 %2120
        %2122 = vrot.lane.b32.xlu0 %v1272, 52
        %v2123 = vpop.permute.xlu0 %2122
        %2124 = vrot.lane.b32.xlu0 %v1274, 52
        %v2125 = vpop.permute.xlu0 %2124
        %2126 = vrot.lane.b32.xlu0 %v1275, 52
        %v2127 = vpop.permute.xlu0 %2126
        %2128 = vrot.lane.b32.xlu0 %v1280, 52
        %v2129 = vpop.permute.xlu0 %2128
        %2130 = vrot.lane.b32.xlu0 %v1282, 52
        %v2131 = vpop.permute.xlu0 %2130
        %2132 = vrot.lane.b32.xlu0 %v1283, 52
        %v2133 = vpop.permute.xlu0 %2132
        %v2159 = vsel %vm1380, %v1388, %v1388
        %2160 = vrot.lane.b32.xlu0 %v1385, 56
        %v2161 = vpop.permute.xlu0 %2160
        %2162 = vrot.lane.b32.xlu0 %v1387, 56
        %v2163 = vpop.permute.xlu0 %2162
        %2164 = vrot.lane.b32.xlu0 %v1389, 56
        %v2165 = vpop.permute.xlu0 %2164
        %2166 = vrot.lane.b32.xlu0 %v2159, 56
        %v2167 = vpop.permute.xlu0 %2166
        %2168 = vrot.lane.b32.xlu0 %v1394, 56
        %v2169 = vpop.permute.xlu0 %2168
        %2170 = vrot.lane.b32.xlu0 %v1396, 56
        %v2171 = vpop.permute.xlu0 %2170
        %2172 = vrot.lane.b32.xlu0 %v1397, 56
        %v2173 = vpop.permute.xlu0 %2172
        %2174 = vrot.lane.b32.xlu0 %v1402, 56
        %v2175 = vpop.permute.xlu0 %2174
        %2176 = vrot.lane.b32.xlu0 %v1404, 56
        %v2177 = vpop.permute.xlu0 %2176
        %2178 = vrot.lane.b32.xlu0 %v1405, 56
        %v2179 = vpop.permute.xlu0 %2178
        %2180 = vrot.lane.b32.xlu0 %v1410, 56
        %v2181 = vpop.permute.xlu0 %2180
        %2182 = vrot.lane.b32.xlu0 %v1412, 56
        %v2183 = vpop.permute.xlu0 %2182
        %2184 = vrot.lane.b32.xlu0 %v1413, 56
        %v2185 = vpop.permute.xlu0 %2184
        %2186 = vrot.lane.b32.xlu0 %v1418, 56
        %v2187 = vpop.permute.xlu0 %2186
        %2188 = vrot.lane.b32.xlu0 %v1420, 56
        %v2189 = vpop.permute.xlu0 %2188
        %2190 = vrot.lane.b32.xlu0 %v1421, 56
        %v2191 = vpop.permute.xlu0 %2190
        %2192 = vrot.lane.b32.xlu0 %v1426, 56
        %v2193 = vpop.permute.xlu0 %2192
        %2194 = vrot.lane.b32.xlu0 %v1428, 56
        %v2195 = vpop.permute.xlu0 %2194
        %2196 = vrot.lane.b32.xlu0 %v1429, 56
        %v2197 = vpop.permute.xlu0 %2196
        %2198 = vrot.lane.b32.xlu0 %v1434, 56
        %v2199 = vpop.permute.xlu0 %2198
        %2200 = vrot.lane.b32.xlu0 %v1436, 56
        %v2201 = vpop.permute.xlu0 %2200
        %2202 = vrot.lane.b32.xlu0 %v1437, 56
        %v2203 = vpop.permute.xlu0 %2202
        %2204 = vrot.lane.b32.xlu0 %v1442, 56
        %v2205 = vpop.permute.xlu0 %2204
        %2206 = vrot.lane.b32.xlu0 %v1444, 56
        %v2207 = vpop.permute.xlu0 %2206
        %2208 = vrot.lane.b32.xlu0 %v1445, 56
        %v2209 = vpop.permute.xlu0 %2208
        %v2235 = vsel %vm1542, %v1550, %v1550
        %2236 = vrot.lane.b32.xlu0 %v1547, 60
        %v2237 = vpop.permute.xlu0 %2236
        %2238 = vrot.lane.b32.xlu0 %v1549, 60
        %v2239 = vpop.permute.xlu0 %2238
        %2240 = vrot.lane.b32.xlu0 %v1551, 60
        %v2241 = vpop.permute.xlu0 %2240
        %2242 = vrot.lane.b32.xlu0 %v2235, 60
        %v2243 = vpop.permute.xlu0 %2242
        %2244 = vrot.lane.b32.xlu0 %v1556, 60
        %v2245 = vpop.permute.xlu0 %2244
        %2246 = vrot.lane.b32.xlu0 %v1558, 60
        %v2247 = vpop.permute.xlu0 %2246
        %2248 = vrot.lane.b32.xlu0 %v1559, 60
        %v2249 = vpop.permute.xlu0 %2248
        %2250 = vrot.lane.b32.xlu0 %v1564, 60
        %v2251 = vpop.permute.xlu0 %2250
        %2252 = vrot.lane.b32.xlu0 %v1566, 60
        %v2253 = vpop.permute.xlu0 %2252
        %2254 = vrot.lane.b32.xlu0 %v1567, 60
        %v2255 = vpop.permute.xlu0 %2254
        %2256 = vrot.lane.b32.xlu0 %v1572, 60
        %v2257 = vpop.permute.xlu0 %2256
        %2258 = vrot.lane.b32.xlu0 %v1574, 60
        %v2259 = vpop.permute.xlu0 %2258
        %2260 = vrot.lane.b32.xlu0 %v1575, 60
        %v2261 = vpop.permute.xlu0 %2260
        %2262 = vrot.lane.b32.xlu0 %v1580, 60
        %v2263 = vpop.permute.xlu0 %2262
        %2264 = vrot.lane.b32.xlu0 %v1582, 60
        %v2265 = vpop.permute.xlu0 %2264
        %2266 = vrot.lane.b32.xlu0 %v1583, 60
        %v2267 = vpop.permute.xlu0 %2266
        %2268 = vrot.lane.b32.xlu0 %v1588, 60
        %v2269 = vpop.permute.xlu0 %2268
        %2270 = vrot.lane.b32.xlu0 %v1590, 60
        %v2271 = vpop.permute.xlu0 %2270
        %2272 = vrot.lane.b32.xlu0 %v1591, 60
        %v2273 = vpop.permute.xlu0 %2272
        %2274 = vrot.lane.b32.xlu0 %v1596, 60
        %v2275 = vpop.permute.xlu0 %2274
        %2276 = vrot.lane.b32.xlu0 %v1598, 60
        %v2277 = vpop.permute.xlu0 %2276
        %2278 = vrot.lane.b32.xlu0 %v1599, 60
        %v2279 = vpop.permute.xlu0 %2278
        %2280 = vrot.lane.b32.xlu0 %v1604, 60
        %v2281 = vpop.permute.xlu0 %2280
        %2282 = vrot.lane.b32.xlu0 %v1606, 60
        %v2283 = vpop.permute.xlu0 %2282
        %2284 = vrot.lane.b32.xlu0 %v1607, 60
        %v2285 = vpop.permute.xlu0 %2284
        %vm2311 = vcmask 31744
        %v2312 = vsel %vm2311, %v291, %v637
        %v2313 = vsel %vm2311, %v292, %v639
        %v2314 = vsel %vm2311, %v293, %v641
        %v2315 = vsel %vm2311, %v294, %v643
        %v2316 = vsel %vm2311, %v323, %v645
        %v2317 = vsel %vm2311, %v324, %v647
        %v2318 = vsel %vm2311, %v325, %v649
        %v2319 = vsel %vm2311, %v326, %v651
        %v2320 = vsel %vm2311, %v355, %v653
        %v2321 = vsel %vm2311, %v356, %v655
        %v2322 = vsel %vm2311, %v357, %v657
        %v2323 = vsel %vm2311, %v358, %v659
        %v2324 = vsel %vm2311, %v387, %v661
        %v2325 = vsel %vm2311, %v388, %v663
        %v2326 = vsel %vm2311, %v389, %v665
        %v2327 = vsel %vm2311, %v390, %v667
        %v2328 = vsel %vm2311, %v419, %v669
        %v2329 = vsel %vm2311, %v420, %v671
        %v2330 = vsel %vm2311, %v421, %v673
        %v2331 = vsel %vm2311, %v422, %v675
        %v2332 = vsel %vm2311, %v451, %v677
        %v2333 = vsel %vm2311, %v452, %v679
        %v2334 = vsel %vm2311, %v453, %v681
        %v2335 = vsel %vm2311, %v454, %v683
        %v2336 = vsel %vm2311, %v483, %v685
        %v2337 = vsel %vm2311, %v484, %v687
        %v2338 = vsel %vm2311, %v485, %v689
        %v2339 = vsel %vm2311, %v486, %v691
        %v2340 = vsel %vm2311, %v515, %v693
        %v2341 = vsel %vm2311, %v516, %v695
        %v2342 = vsel %vm2311, %v517, %v697
        %v2343 = vsel %vm2311, %v518, %v699
        %vm2344 = vcmask 64512
        %v2345 = vsel %vm2344, %v2312, %v799
        %v2346 = vsel %vm2344, %v2313, %v801
        %v2347 = vsel %vm2344, %v2314, %v803
        %v2348 = vsel %vm2344, %v2315, %v805
        %v2349 = vsel %vm2344, %v2316, %v807
        %v2350 = vsel %vm2344, %v2317, %v809
        %v2351 = vsel %vm2344, %v2318, %v811
        %v2352 = vsel %vm2344, %v2319, %v813
        %v2353 = vsel %vm2344, %v2320, %v815
        %v2354 = vsel %vm2344, %v2321, %v817
        %v2355 = vsel %vm2344, %v2322, %v819
        %v2356 = vsel %vm2344, %v2323, %v821
        %v2357 = vsel %vm2344, %v2324, %v823
        %v2358 = vsel %vm2344, %v2325, %v825
        %v2359 = vsel %vm2344, %v2326, %v827
        %v2360 = vsel %vm2344, %v2327, %v829
        %v2361 = vsel %vm2344, %v2328, %v831
        %v2362 = vsel %vm2344, %v2329, %v833
        %v2363 = vsel %vm2344, %v2330, %v835
        %v2364 = vsel %vm2344, %v2331, %v837
        %v2365 = vsel %vm2344, %v2332, %v839
        %v2366 = vsel %vm2344, %v2333, %v841
        %v2367 = vsel %vm2344, %v2334, %v843
        %v2368 = vsel %vm2344, %v2335, %v845
        %v2369 = vsel %vm2344, %v2336, %v847
        %v2370 = vsel %vm2344, %v2337, %v849
        %v2371 = vsel %vm2344, %v2338, %v851
        %v2372 = vsel %vm2344, %v2339, %v853
        %v2373 = vsel %vm2344, %v2340, %v855
        %v2374 = vsel %vm2344, %v2341, %v857
        %v2375 = vsel %vm2344, %v2342, %v859
        %v2376 = vsel %vm2344, %v2343, %v861
        %vm2377 = vcmask 97280
        %v2378 = vsel %vm2377, %v2345, %v961
        %v2379 = vsel %vm2377, %v2346, %v963
        %v2380 = vsel %vm2377, %v2347, %v965
        %v2381 = vsel %vm2377, %v2348, %v967
        %v2382 = vsel %vm2377, %v2349, %v969
        %v2383 = vsel %vm2377, %v2350, %v971
        %v2384 = vsel %vm2377, %v2351, %v973
        %v2385 = vsel %vm2377, %v2352, %v975
        %v2386 = vsel %vm2377, %v2353, %v977
        %v2387 = vsel %vm2377, %v2354, %v979
        %v2388 = vsel %vm2377, %v2355, %v981
        %v2389 = vsel %vm2377, %v2356, %v983
        %v2390 = vsel %vm2377, %v2357, %v985
        %v2391 = vsel %vm2377, %v2358, %v987
        %v2392 = vsel %vm2377, %v2359, %v989
        %v2393 = vsel %vm2377, %v2360, %v991
        %v2394 = vsel %vm2377, %v2361, %v993
        %v2395 = vsel %vm2377, %v2362, %v995
        %v2396 = vsel %vm2377, %v2363, %v997
        %v2397 = vsel %vm2377, %v2364, %v999
        %v2398 = vsel %vm2377, %v2365, %v1001
        %v2399 = vsel %vm2377, %v2366, %v1003
        %v2400 = vsel %vm2377, %v2367, %v1005
        %v2401 = vsel %vm2377, %v2368, %v1007
        %v2402 = vsel %vm2377, %v2369, %v1009
        %v2403 = vsel %vm2377, %v2370, %v1011
        %v2404 = vsel %vm2377, %v2371, %v1013
        %v2405 = vsel %vm2377, %v2372, %v1015
        %v2406 = vsel %vm2377, %v2373, %v1017
        %v2407 = vsel %vm2377, %v2374, %v1019
        %v2408 = vsel %vm2377, %v2375, %v1021
        %v2409 = vsel %vm2377, %v2376, %v1023
        %vm2410 = vcmask 130048
        %v2411 = vsel %vm2410, %v2378, %v1123
        %v2412 = vsel %vm2410, %v2379, %v1125
        %v2413 = vsel %vm2410, %v2380, %v1127
        %v2414 = vsel %vm2410, %v2381, %v1129
        %v2415 = vsel %vm2410, %v2382, %v1131
        %v2416 = vsel %vm2410, %v2383, %v1133
        %v2417 = vsel %vm2410, %v2384, %v1135
        %v2418 = vsel %vm2410, %v2385, %v1137
        %v2419 = vsel %vm2410, %v2386, %v1139
        %v2420 = vsel %vm2410, %v2387, %v1141
        %v2421 = vsel %vm2410, %v2388, %v1143
        %v2422 = vsel %vm2410, %v2389, %v1145
        %v2423 = vsel %vm2410, %v2390, %v1147
        %v2424 = vsel %vm2410, %v2391, %v1149
        %v2425 = vsel %vm2410, %v2392, %v1151
        %v2426 = vsel %vm2410, %v2393, %v1153
        %v2427 = vsel %vm2410, %v2394, %v1155
        %v2428 = vsel %vm2410, %v2395, %v1157
        %v2429 = vsel %vm2410, %v2396, %v1159
        %v2430 = vsel %vm2410, %v2397, %v1161
        %v2431 = vsel %vm2410, %v2398, %v1163
        %v2432 = vsel %vm2410, %v2399, %v1165
        %v2433 = vsel %vm2410, %v2400, %v1167
        %v2434 = vsel %vm2410, %v2401, %v1169
        %v2435 = vsel %vm2410, %v2402, %v1171
        %v2436 = vsel %vm2410, %v2403, %v1173
        %v2437 = vsel %vm2410, %v2404, %v1175
        %v2438 = vsel %vm2410, %v2405, %v1177
        %v2439 = vsel %vm2410, %v2406, %v1179
        %v2440 = vsel %vm2410, %v2407, %v1181
        %v2441 = vsel %vm2410, %v2408, %v1183
        %v2442 = vsel %vm2410, %v2409, %v1185
        %vm2443 = vcmask 162816
        %v2444 = vsel %vm2443, %v2411, %v1285
        %v2445 = vsel %vm2443, %v2412, %v1287
        %v2446 = vsel %vm2443, %v2413, %v1289
        %v2447 = vsel %vm2443, %v2414, %v1291
        %v2448 = vsel %vm2443, %v2415, %v1293
        %v2449 = vsel %vm2443, %v2416, %v1295
        %v2450 = vsel %vm2443, %v2417, %v1297
        %v2451 = vsel %vm2443, %v2418, %v1299
        %v2452 = vsel %vm2443, %v2419, %v1301
        %v2453 = vsel %vm2443, %v2420, %v1303
        %v2454 = vsel %vm2443, %v2421, %v1305
        %v2455 = vsel %vm2443, %v2422, %v1307
        %v2456 = vsel %vm2443, %v2423, %v1309
        %v2457 = vsel %vm2443, %v2424, %v1311
        %v2458 = vsel %vm2443, %v2425, %v1313
        %v2459 = vsel %vm2443, %v2426, %v1315
        %v2460 = vsel %vm2443, %v2427, %v1317
        %v2461 = vsel %vm2443, %v2428, %v1319
        %v2462 = vsel %vm2443, %v2429, %v1321
        %v2463 = vsel %vm2443, %v2430, %v1323
        %v2464 = vsel %vm2443, %v2431, %v1325
        %v2465 = vsel %vm2443, %v2432, %v1327
        %v2466 = vsel %vm2443, %v2433, %v1329
        %v2467 = vsel %vm2443, %v2434, %v1331
        %v2468 = vsel %vm2443, %v2435, %v1333
        %v2469 = vsel %vm2443, %v2436, %v1335
        %v2470 = vsel %vm2443, %v2437, %v1337
        %v2471 = vsel %vm2443, %v2438, %v1339
        %v2472 = vsel %vm2443, %v2439, %v1341
        %v2473 = vsel %vm2443, %v2440, %v1343
        %v2474 = vsel %vm2443, %v2441, %v1345
        %v2475 = vsel %vm2443, %v2442, %v1347
        %vm2476 = vcmask 195584
        %v2477 = vsel %vm2476, %v2444, %v1447
        %v2478 = vsel %vm2476, %v2445, %v1449
        %v2479 = vsel %vm2476, %v2446, %v1451
        %v2480 = vsel %vm2476, %v2447, %v1453
        %v2481 = vsel %vm2476, %v2448, %v1455
        %v2482 = vsel %vm2476, %v2449, %v1457
        %v2483 = vsel %vm2476, %v2450, %v1459
        %v2484 = vsel %vm2476, %v2451, %v1461
        %v2485 = vsel %vm2476, %v2452, %v1463
        %v2486 = vsel %vm2476, %v2453, %v1465
        %v2487 = vsel %vm2476, %v2454, %v1467
        %v2488 = vsel %vm2476, %v2455, %v1469
        %v2489 = vsel %vm2476, %v2456, %v1471
        %v2490 = vsel %vm2476, %v2457, %v1473
        %v2491 = vsel %vm2476, %v2458, %v1475
        %v2492 = vsel %vm2476, %v2459, %v1477
        %v2493 = vsel %vm2476, %v2460, %v1479
        %v2494 = vsel %vm2476, %v2461, %v1481
        %v2495 = vsel %vm2476, %v2462, %v1483
        %v2496 = vsel %vm2476, %v2463, %v1485
        %v2497 = vsel %vm2476, %v2464, %v1487
        %v2498 = vsel %vm2476, %v2465, %v1489
        %v2499 = vsel %vm2476, %v2466, %v1491
        %v2500 = vsel %vm2476, %v2467, %v1493
        %v2501 = vsel %vm2476, %v2468, %v1495
        %v2502 = vsel %vm2476, %v2469, %v1497
        %v2503 = vsel %vm2476, %v2470, %v1499
        %v2504 = vsel %vm2476, %v2471, %v1501
        %v2505 = vsel %vm2476, %v2472, %v1503
        %v2506 = vsel %vm2476, %v2473, %v1505
        %v2507 = vsel %vm2476, %v2474, %v1507
        %v2508 = vsel %vm2476, %v2475, %v1509
        %vm2509 = vcmask 228352
        %v2510 = vsel %vm2509, %v2477, %v1609
        %v2511 = vsel %vm2509, %v2478, %v1611
        %v2512 = vsel %vm2509, %v2479, %v1613
        %v2513 = vsel %vm2509, %v2480, %v1615
        %v2514 = vsel %vm2509, %v2481, %v1617
        %v2515 = vsel %vm2509, %v2482, %v1619
        %v2516 = vsel %vm2509, %v2483, %v1621
        %v2517 = vsel %vm2509, %v2484, %v1623
        %v2518 = vsel %vm2509, %v2485, %v1625
        %v2519 = vsel %vm2509, %v2486, %v1627
        %v2520 = vsel %vm2509, %v2487, %v1629
        %v2521 = vsel %vm2509, %v2488, %v1631
        %v2522 = vsel %vm2509, %v2489, %v1633
        %v2523 = vsel %vm2509, %v2490, %v1635
        %v2524 = vsel %vm2509, %v2491, %v1637
        %v2525 = vsel %vm2509, %v2492, %v1639
        %v2526 = vsel %vm2509, %v2493, %v1641
        %v2527 = vsel %vm2509, %v2494, %v1643
        %v2528 = vsel %vm2509, %v2495, %v1645
        %v2529 = vsel %vm2509, %v2496, %v1647
        %v2530 = vsel %vm2509, %v2497, %v1649
        %v2531 = vsel %vm2509, %v2498, %v1651
        %v2532 = vsel %vm2509, %v2499, %v1653
        %v2533 = vsel %vm2509, %v2500, %v1655
        %v2534 = vsel %vm2509, %v2501, %v1657
        %v2535 = vsel %vm2509, %v2502, %v1659
        %v2536 = vsel %vm2509, %v2503, %v1661
        %v2537 = vsel %vm2509, %v2504, %v1663
        %v2538 = vsel %vm2509, %v2505, %v1665
        %v2539 = vsel %vm2509, %v2506, %v1667
        %v2540 = vsel %vm2509, %v2507, %v1669
        %v2541 = vsel %vm2509, %v2508, %v1671
        %vm2542 = vcmask 261120
        %v2543 = vsel %vm2542, %v2510, %v1705
        %v2544 = vsel %vm2542, %v2511, %v1707
        %v2545 = vsel %vm2542, %v2512, %v1709
        %v2546 = vsel %vm2542, %v2513, %v1711
        %v2547 = vsel %vm2542, %v2514, %v1713
        %v2548 = vsel %vm2542, %v2515, %v1715
        %v2549 = vsel %vm2542, %v2516, %v1717
        %v2550 = vsel %vm2542, %v2517, %v1711
        %v2551 = vsel %vm2542, %v2518, %v1719
        %v2552 = vsel %vm2542, %v2519, %v1721
        %v2553 = vsel %vm2542, %v2520, %v1723
        %v2554 = vsel %vm2542, %v2521, %v1711
        %v2555 = vsel %vm2542, %v2522, %v1725
        %v2556 = vsel %vm2542, %v2523, %v1727
        %v2557 = vsel %vm2542, %v2524, %v1729
        %v2558 = vsel %vm2542, %v2525, %v1711
        %v2559 = vsel %vm2542, %v2526, %v1731
        %v2560 = vsel %vm2542, %v2527, %v1733
        %v2561 = vsel %vm2542, %v2528, %v1735
        %v2562 = vsel %vm2542, %v2529, %v1711
        %v2563 = vsel %vm2542, %v2530, %v1737
        %v2564 = vsel %vm2542, %v2531, %v1739
        %v2565 = vsel %vm2542, %v2532, %v1741
        %v2566 = vsel %vm2542, %v2533, %v1711
        %v2567 = vsel %vm2542, %v2534, %v1743
        %v2568 = vsel %vm2542, %v2535, %v1745
        %v2569 = vsel %vm2542, %v2536, %v1747
        %v2570 = vsel %vm2542, %v2537, %v1711
        %v2571 = vsel %vm2542, %v2538, %v1749
        %v2572 = vsel %vm2542, %v2539, %v1751
        %v2573 = vsel %vm2542, %v2540, %v1753
        %v2574 = vsel %vm2542, %v2541, %v1711
        %vm2575 = vcmask 293888
        %v2576 = vsel %vm2575, %v2543, %v1781
        %v2577 = vsel %vm2575, %v2544, %v1783
        %v2578 = vsel %vm2575, %v2545, %v1785
        %v2579 = vsel %vm2575, %v2546, %v1787
        %v2580 = vsel %vm2575, %v2547, %v1789
        %v2581 = vsel %vm2575, %v2548, %v1791
        %v2582 = vsel %vm2575, %v2549, %v1793
        %v2583 = vsel %vm2575, %v2550, %v1787
        %v2584 = vsel %vm2575, %v2551, %v1795
        %v2585 = vsel %vm2575, %v2552, %v1797
        %v2586 = vsel %vm2575, %v2553, %v1799
        %v2587 = vsel %vm2575, %v2554, %v1787
        %v2588 = vsel %vm2575, %v2555, %v1801
        %v2589 = vsel %vm2575, %v2556, %v1803
        %v2590 = vsel %vm2575, %v2557, %v1805
        %v2591 = vsel %vm2575, %v2558, %v1787
        %v2592 = vsel %vm2575, %v2559, %v1807
        %v2593 = vsel %vm2575, %v2560, %v1809
        %v2594 = vsel %vm2575, %v2561, %v1811
        %v2595 = vsel %vm2575, %v2562, %v1787
        %v2596 = vsel %vm2575, %v2563, %v1813
        %v2597 = vsel %vm2575, %v2564, %v1815
        %v2598 = vsel %vm2575, %v2565, %v1817
        %v2599 = vsel %vm2575, %v2566, %v1787
        %v2600 = vsel %vm2575, %v2567, %v1819
        %v2601 = vsel %vm2575, %v2568, %v1821
        %v2602 = vsel %vm2575, %v2569, %v1823
        %v2603 = vsel %vm2575, %v2570, %v1787
        %v2604 = vsel %vm2575, %v2571, %v1825
        %v2605 = vsel %vm2575, %v2572, %v1827
        %v2606 = vsel %vm2575, %v2573, %v1829
        %v2607 = vsel %vm2575, %v2574, %v1787
        %vm2608 = vcmask 326656
        %v2609 = vsel %vm2608, %v2576, %v1857
        %v2610 = vsel %vm2608, %v2577, %v1859
        %v2611 = vsel %vm2608, %v2578, %v1861
        %v2612 = vsel %vm2608, %v2579, %v1863
        %v2613 = vsel %vm2608, %v2580, %v1865
        %v2614 = vsel %vm2608, %v2581, %v1867
        %v2615 = vsel %vm2608, %v2582, %v1869
        %v2616 = vsel %vm2608, %v2583, %v1863
        %v2617 = vsel %vm2608, %v2584, %v1871
        %v2618 = vsel %vm2608, %v2585, %v1873
        %v2619 = vsel %vm2608, %v2586, %v1875
        %v2620 = vsel %vm2608, %v2587, %v1863
        %v2621 = vsel %vm2608, %v2588, %v1877
        %v2622 = vsel %vm2608, %v2589, %v1879
        %v2623 = vsel %vm2608, %v2590, %v1881
        %v2624 = vsel %vm2608, %v2591, %v1863
        %v2625 = vsel %vm2608, %v2592, %v1883
        %v2626 = vsel %vm2608, %v2593, %v1885
        %v2627 = vsel %vm2608, %v2594, %v1887
        %v2628 = vsel %vm2608, %v2595, %v1863
        %v2629 = vsel %vm2608, %v2596, %v1889
        %v2630 = vsel %vm2608, %v2597, %v1891
        %v2631 = vsel %vm2608, %v2598, %v1893
        %v2632 = vsel %vm2608, %v2599, %v1863
        %v2633 = vsel %vm2608, %v2600, %v1895
        %v2634 = vsel %vm2608, %v2601, %v1897
        %v2635 = vsel %vm2608, %v2602, %v1899
        %v2636 = vsel %vm2608, %v2603, %v1863
        %v2637 = vsel %vm2608, %v2604, %v1901
        %v2638 = vsel %vm2608, %v2605, %v1903
        %v2639 = vsel %vm2608, %v2606, %v1905
        %v2640 = vsel %vm2608, %v2607, %v1863
        %vm2641 = vcmask 359424
        %v2642 = vsel %vm2641, %v2609, %v1933
        %v2643 = vsel %vm2641, %v2610, %v1935
        %v2644 = vsel %vm2641, %v2611, %v1937
        %v2645 = vsel %vm2641, %v2612, %v1939
        %v2646 = vsel %vm2641, %v2613, %v1941
        %v2647 = vsel %vm2641, %v2614, %v1943
        %v2648 = vsel %vm2641, %v2615, %v1945
        %v2649 = vsel %vm2641, %v2616, %v1939
        %v2650 = vsel %vm2641, %v2617, %v1947
        %v2651 = vsel %vm2641, %v2618, %v1949
        %v2652 = vsel %vm2641, %v2619, %v1951
        %v2653 = vsel %vm2641, %v2620, %v1939
        %v2654 = vsel %vm2641, %v2621, %v1953
        %v2655 = vsel %vm2641, %v2622, %v1955
        %v2656 = vsel %vm2641, %v2623, %v1957
        %v2657 = vsel %vm2641, %v2624, %v1939
        %v2658 = vsel %vm2641, %v2625, %v1959
        %v2659 = vsel %vm2641, %v2626, %v1961
        %v2660 = vsel %vm2641, %v2627, %v1963
        %v2661 = vsel %vm2641, %v2628, %v1939
        %v2662 = vsel %vm2641, %v2629, %v1965
        %v2663 = vsel %vm2641, %v2630, %v1967
        %v2664 = vsel %vm2641, %v2631, %v1969
        %v2665 = vsel %vm2641, %v2632, %v1939
        %v2666 = vsel %vm2641, %v2633, %v1971
        %v2667 = vsel %vm2641, %v2634, %v1973
        %v2668 = vsel %vm2641, %v2635, %v1975
        %v2669 = vsel %vm2641, %v2636, %v1939
        %v2670 = vsel %vm2641, %v2637, %v1977
        %v2671 = vsel %vm2641, %v2638, %v1979
        %v2672 = vsel %vm2641, %v2639, %v1981
        %v2673 = vsel %vm2641, %v2640, %v1939
        %vm2674 = vcmask 392192
        %v2675 = vsel %vm2674, %v2642, %v2009
        %v2676 = vsel %vm2674, %v2643, %v2011
        %v2677 = vsel %vm2674, %v2644, %v2013
        %v2678 = vsel %vm2674, %v2645, %v2015
        %v2679 = vsel %vm2674, %v2646, %v2017
        %v2680 = vsel %vm2674, %v2647, %v2019
        %v2681 = vsel %vm2674, %v2648, %v2021
        %v2682 = vsel %vm2674, %v2649, %v2015
        %v2683 = vsel %vm2674, %v2650, %v2023
        %v2684 = vsel %vm2674, %v2651, %v2025
        %v2685 = vsel %vm2674, %v2652, %v2027
        %v2686 = vsel %vm2674, %v2653, %v2015
        %v2687 = vsel %vm2674, %v2654, %v2029
        %v2688 = vsel %vm2674, %v2655, %v2031
        %v2689 = vsel %vm2674, %v2656, %v2033
        %v2690 = vsel %vm2674, %v2657, %v2015
        %v2691 = vsel %vm2674, %v2658, %v2035
        %v2692 = vsel %vm2674, %v2659, %v2037
        %v2693 = vsel %vm2674, %v2660, %v2039
        %v2694 = vsel %vm2674, %v2661, %v2015
        %v2695 = vsel %vm2674, %v2662, %v2041
        %v2696 = vsel %vm2674, %v2663, %v2043
        %v2697 = vsel %vm2674, %v2664, %v2045
        %v2698 = vsel %vm2674, %v2665, %v2015
        %v2699 = vsel %vm2674, %v2666, %v2047
        %v2700 = vsel %vm2674, %v2667, %v2049
        %v2701 = vsel %vm2674, %v2668, %v2051
        %v2702 = vsel %vm2674, %v2669, %v2015
        %v2703 = vsel %vm2674, %v2670, %v2053
        %v2704 = vsel %vm2674, %v2671, %v2055
        %v2705 = vsel %vm2674, %v2672, %v2057
        %v2706 = vsel %vm2674, %v2673, %v2015
        %vm2707 = vcmask 424960
        %v2708 = vsel %vm2707, %v2675, %v2085
        %v2709 = vsel %vm2707, %v2676, %v2087
        %v2710 = vsel %vm2707, %v2677, %v2089
        %v2711 = vsel %vm2707, %v2678, %v2091
        %v2712 = vsel %vm2707, %v2679, %v2093
        %v2713 = vsel %vm2707, %v2680, %v2095
        %v2714 = vsel %vm2707, %v2681, %v2097
        %v2715 = vsel %vm2707, %v2682, %v2091
        %v2716 = vsel %vm2707, %v2683, %v2099
        %v2717 = vsel %vm2707, %v2684, %v2101
        %v2718 = vsel %vm2707, %v2685, %v2103
        %v2719 = vsel %vm2707, %v2686, %v2091
        %v2720 = vsel %vm2707, %v2687, %v2105
        %v2721 = vsel %vm2707, %v2688, %v2107
        %v2722 = vsel %vm2707, %v2689, %v2109
        %v2723 = vsel %vm2707, %v2690, %v2091
        %v2724 = vsel %vm2707, %v2691, %v2111
        %v2725 = vsel %vm2707, %v2692, %v2113
        %v2726 = vsel %vm2707, %v2693, %v2115
        %v2727 = vsel %vm2707, %v2694, %v2091
        %v2728 = vsel %vm2707, %v2695, %v2117
        %v2729 = vsel %vm2707, %v2696, %v2119
        %v2730 = vsel %vm2707, %v2697, %v2121
        %v2731 = vsel %vm2707, %v2698, %v2091
        %v2732 = vsel %vm2707, %v2699, %v2123
        %v2733 = vsel %vm2707, %v2700, %v2125
        %v2734 = vsel %vm2707, %v2701, %v2127
        %v2735 = vsel %vm2707, %v2702, %v2091
        %v2736 = vsel %vm2707, %v2703, %v2129
        %v2737 = vsel %vm2707, %v2704, %v2131
        %v2738 = vsel %vm2707, %v2705, %v2133
        %v2739 = vsel %vm2707, %v2706, %v2091
        %vm2740 = vcmask 457728
        %v2741 = vsel %vm2740, %v2708, %v2161
        %v2742 = vsel %vm2740, %v2709, %v2163
        %v2743 = vsel %vm2740, %v2710, %v2165
        %v2744 = vsel %vm2740, %v2711, %v2167
        %v2745 = vsel %vm2740, %v2712, %v2169
        %v2746 = vsel %vm2740, %v2713, %v2171
        %v2747 = vsel %vm2740, %v2714, %v2173
        %v2748 = vsel %vm2740, %v2715, %v2167
        %v2749 = vsel %vm2740, %v2716, %v2175
        %v2750 = vsel %vm2740, %v2717, %v2177
        %v2751 = vsel %vm2740, %v2718, %v2179
        %v2752 = vsel %vm2740, %v2719, %v2167
        %v2753 = vsel %vm2740, %v2720, %v2181
        %v2754 = vsel %vm2740, %v2721, %v2183
        %v2755 = vsel %vm2740, %v2722, %v2185
        %v2756 = vsel %vm2740, %v2723, %v2167
        %v2757 = vsel %vm2740, %v2724, %v2187
        %v2758 = vsel %vm2740, %v2725, %v2189
        %v2759 = vsel %vm2740, %v2726, %v2191
        %v2760 = vsel %vm2740, %v2727, %v2167
        %v2761 = vsel %vm2740, %v2728, %v2193
        %v2762 = vsel %vm2740, %v2729, %v2195
        %v2763 = vsel %vm2740, %v2730, %v2197
        %v2764 = vsel %vm2740, %v2731, %v2167
        %v2765 = vsel %vm2740, %v2732, %v2199
        %v2766 = vsel %vm2740, %v2733, %v2201
        %v2767 = vsel %vm2740, %v2734, %v2203
        %v2768 = vsel %vm2740, %v2735, %v2167
        %v2769 = vsel %vm2740, %v2736, %v2205
        %v2770 = vsel %vm2740, %v2737, %v2207
        %v2771 = vsel %vm2740, %v2738, %v2209
        %v2772 = vsel %vm2740, %v2739, %v2167
        %vm2773 = vcmask 490496
        %v2774 = vsel %vm2773, %v2741, %v2237
        %v2775 = vsel %vm2773, %v2742, %v2239
        %v2776 = vsel %vm2773, %v2743, %v2241
        %v2777 = vsel %vm2773, %v2744, %v2243
        %v2778 = vsel %vm2773, %v2745, %v2245
        %v2779 = vsel %vm2773, %v2746, %v2247
        %v2780 = vsel %vm2773, %v2747, %v2249
        %v2781 = vsel %vm2773, %v2748, %v2243
        %v2782 = vsel %vm2773, %v2749, %v2251
        %v2783 = vsel %vm2773, %v2750, %v2253
        %v2784 = vsel %vm2773, %v2751, %v2255
        %v2785 = vsel %vm2773, %v2752, %v2243
        %v2786 = vsel %vm2773, %v2753, %v2257
        %v2787 = vsel %vm2773, %v2754, %v2259
        %v2788 = vsel %vm2773, %v2755, %v2261
        %v2789 = vsel %vm2773, %v2756, %v2243
        %v2790 = vsel %vm2773, %v2757, %v2263
        %v2791 = vsel %vm2773, %v2758, %v2265
        %v2792 = vsel %vm2773, %v2759, %v2267
        %v2793 = vsel %vm2773, %v2760, %v2243
        %v2794 = vsel %vm2773, %v2761, %v2269
        %v2795 = vsel %vm2773, %v2762, %v2271
        %v2796 = vsel %vm2773, %v2763, %v2273
        %v2797 = vsel %vm2773, %v2764, %v2243
        %v2798 = vsel %vm2773, %v2765, %v2275
        %v2799 = vsel %vm2773, %v2766, %v2277
        %v2800 = vsel %vm2773, %v2767, %v2279
        %v2801 = vsel %vm2773, %v2768, %v2243
        %v2802 = vsel %vm2773, %v2769, %v2281
        %v2803 = vsel %vm2773, %v2770, %v2283
        %v2804 = vsel %vm2773, %v2771, %v2285
        %v2805 = vsel %vm2773, %v2772, %v2243
        %v2806 = vld [vmem:[%s1] sm:$0xff]
        %v2807 = vld [vmem:[%s1 + $0x8] sm:$0xff]
        %v2808 = vld [vmem:[%s1 + $0x10] sm:$0xff]
        %v2809 = vld [vmem:[%s1 + $0x18] sm:$0xff]
        %v2810 = vld [vmem:[%s1 + $0x20] sm:$0xff]
        %v2811 = vld [vmem:[%s1 + $0x28] sm:$0xff]
        %v2812 = vld [vmem:[%s1 + $0x30] sm:$0xff]
        %v2813 = vld [vmem:[%s1 + $0x38] sm:$0xff]
        %vm2814 = vcmask 523264
        %v2816 = vsel %vm2814, %v2774, 0
        %v2819 = vsel %vm2814, %v2775, 0
        %v2822 = vsel %vm2814, %v2776, 0
        %v2825 = vsel %vm2814, %v2777, 0
        %v2828 = vsel %vm2814, %v2778, 0
        %v2831 = vsel %vm2814, %v2779, 0
        %v2834 = vsel %vm2814, %v2780, 0
        %v2837 = vsel %vm2814, %v2781, 0
        %v2840 = vsel %vm2814, %v2782, 0
        %v2843 = vsel %vm2814, %v2783, 0
        %v2846 = vsel %vm2814, %v2784, 0
        %v2849 = vsel %vm2814, %v2785, 0
        %v2852 = vsel %vm2814, %v2786, 0
        %v2855 = vsel %vm2814, %v2787, 0
        %v2858 = vsel %vm2814, %v2788, 0
        %v2861 = vsel %vm2814, %v2789, 0
        %v2864 = vsel %vm2814, %v2790, 0
        %v2867 = vsel %vm2814, %v2791, 0
        %v2870 = vsel %vm2814, %v2792, 0
        %v2873 = vsel %vm2814, %v2793, 0
        %v2876 = vsel %vm2814, %v2794, 0
        %v2879 = vsel %vm2814, %v2795, 0
        %v2882 = vsel %vm2814, %v2796, 0
        %v2885 = vsel %vm2814, %v2797, 0
        %v2888 = vsel %vm2814, %v2798, 0
        %v2891 = vsel %vm2814, %v2799, 0
        %v2894 = vsel %vm2814, %v2800, 0
        %v2897 = vsel %vm2814, %v2801, 0
        %v2900 = vsel %vm2814, %v2802, 0
        %v2903 = vsel %vm2814, %v2803, 0
        %v2906 = vsel %vm2814, %v2804, 0
        %v2909 = vsel %vm2814, %v2805, 0
        %2911 = vmatpush.msra.mxu0 0.0
        %2912 = vmatpush.msra.mxu0 0.0
        %2913 = vmatpush.msra.mxu0 0.0
        %2914 = vmatpush.msra.mxu0 0.0
        %2915 = vmatpush.msra.mxu0 0.0
        %2916 = vmatpush.msra.mxu0 0.0
        %2917 = vmatpush.msra.mxu0 0.0
        %2918 = vmatpush.msra.mxu0 0.0
        %2919 = vmatpush.msra.mxu0 %v2813
        %2920 = vmatpush.msra.mxu0 %v2812
        %2921 = vmatpush.msra.mxu0 %v2811
        %2922 = vmatpush.msra.mxu0 %v2810
        %2923 = vmatpush.msra.mxu0 %v2809
        %2924 = vmatpush.msra.mxu0 %v2808
        %2925 = vmatpush.msra.mxu0 %v2807
        %2926 = vmatpush.msra.mxu0 %v2806
        %2927 = vmatmul.f32.gmra.mxu0 %v2816
        %v2928 = vpop.f32.mrf.mxu0
        %v2929 = vadd.f32 0.0, %v2928
        %2930 = vmatmul.f32.gmra.mxu0 %v2819
        %v2931 = vpop.f32.mrf.mxu0
        %v2932 = vadd.f32 0.0, %v2931
        %2933 = vmatmul.f32.gmra.mxu0 %v2822
        %v2934 = vpop.f32.mrf.mxu0
        %v2935 = vadd.f32 0.0, %v2934
        %2936 = vmatmul.f32.gmra.mxu0 %v2825
        %v2937 = vpop.f32.mrf.mxu0
        %v2938 = vadd.f32 0.0, %v2937
        %2939 = vmatmul.f32.gmra.mxu0 %v2828
        %v2940 = vpop.f32.mrf.mxu0
        %v2941 = vadd.f32 0.0, %v2940
        %2942 = vmatmul.f32.gmra.mxu0 %v2831
        %v2943 = vpop.f32.mrf.mxu0
        %v2944 = vadd.f32 0.0, %v2943
        %2945 = vmatmul.f32.gmra.mxu0 %v2834
        %v2946 = vpop.f32.mrf.mxu0
        %v2947 = vadd.f32 0.0, %v2946
        %2948 = vmatmul.f32.gmra.mxu0 %v2837
        %v2949 = vpop.f32.mrf.mxu0
        %v2950 = vadd.f32 0.0, %v2949
        %2951 = vmatmul.f32.gmra.mxu0 %v2840
        %v2952 = vpop.f32.mrf.mxu0
        %v2953 = vadd.f32 0.0, %v2952
        %2954 = vmatmul.f32.gmra.mxu0 %v2843
        %v2955 = vpop.f32.mrf.mxu0
        %v2956 = vadd.f32 0.0, %v2955
        %2957 = vmatmul.f32.gmra.mxu0 %v2846
        %v2958 = vpop.f32.mrf.mxu0
        %v2959 = vadd.f32 0.0, %v2958
        %2960 = vmatmul.f32.gmra.mxu0 %v2849
        %v2961 = vpop.f32.mrf.mxu0
        %v2962 = vadd.f32 0.0, %v2961
        %2963 = vmatmul.f32.gmra.mxu0 %v2852
        %v2964 = vpop.f32.mrf.mxu0
        %v2965 = vadd.f32 0.0, %v2964
        %2966 = vmatmul.f32.gmra.mxu0 %v2855
        %v2967 = vpop.f32.mrf.mxu0
        %v2968 = vadd.f32 0.0, %v2967
        %2969 = vmatmul.f32.gmra.mxu0 %v2858
        %v2970 = vpop.f32.mrf.mxu0
        %v2971 = vadd.f32 0.0, %v2970
        %2972 = vmatmul.f32.gmra.mxu0 %v2861
        %v2973 = vpop.f32.mrf.mxu0
        %v2974 = vadd.f32 0.0, %v2973
        %2975 = vmatmul.f32.gmra.mxu0 %v2864
        %v2976 = vpop.f32.mrf.mxu0
        %v2977 = vadd.f32 0.0, %v2976
        %2978 = vmatmul.f32.gmra.mxu0 %v2867
        %v2979 = vpop.f32.mrf.mxu0
        %v2980 = vadd.f32 0.0, %v2979
        %2981 = vmatmul.f32.gmra.mxu0 %v2870
        %v2982 = vpop.f32.mrf.mxu0
        %v2983 = vadd.f32 0.0, %v2982
        %2984 = vmatmul.f32.gmra.mxu0 %v2873
        %v2985 = vpop.f32.mrf.mxu0
        %v2986 = vadd.f32 0.0, %v2985
        %2987 = vmatmul.f32.gmra.mxu0 %v2876
        %v2988 = vpop.f32.mrf.mxu0
        %v2989 = vadd.f32 0.0, %v2988
        %2990 = vmatmul.f32.gmra.mxu0 %v2879
        %v2991 = vpop.f32.mrf.mxu0
        %v2992 = vadd.f32 0.0, %v2991
        %2993 = vmatmul.f32.gmra.mxu0 %v2882
        %v2994 = vpop.f32.mrf.mxu0
        %v2995 = vadd.f32 0.0, %v2994
        %2996 = vmatmul.f32.gmra.mxu0 %v2885
        %v2997 = vpop.f32.mrf.mxu0
        %v2998 = vadd.f32 0.0, %v2997
        %2999 = vmatmul.f32.gmra.mxu0 %v2888
        %v3000 = vpop.f32.mrf.mxu0
        %v3001 = vadd.f32 0.0, %v3000
        %3002 = vmatmul.f32.gmra.mxu0 %v2891
        %v3003 = vpop.f32.mrf.mxu0
        %v3004 = vadd.f32 0.0, %v3003
        %3005 = vmatmul.f32.gmra.mxu0 %v2894
        %v3006 = vpop.f32.mrf.mxu0
        %v3007 = vadd.f32 0.0, %v3006
        %3008 = vmatmul.f32.gmra.mxu0 %v2897
        %v3009 = vpop.f32.mrf.mxu0
        %v3010 = vadd.f32 0.0, %v3009
        %3011 = vmatmul.f32.gmra.mxu0 %v2900
        %v3012 = vpop.f32.mrf.mxu0
        %v3013 = vadd.f32 0.0, %v3012
        %3014 = vmatmul.f32.gmra.mxu0 %v2903
        %v3015 = vpop.f32.mrf.mxu0
        %v3016 = vadd.f32 0.0, %v3015
        %3017 = vmatmul.f32.gmra.mxu0 %v2906
        %v3018 = vpop.f32.mrf.mxu0
        %v3019 = vadd.f32 0.0, %v3018
        %3020 = vmatmul.f32.gmra.mxu0 %v2909
        %v3021 = vpop.f32.mrf.mxu0
        %v3022 = vadd.f32 0.0, %v3021
        %3023 = vdwg.mxu0
        %v3024 = vperm.slane %v531, 0
        %vm3025 = vcmp.lt.s32.totalorder %v533, %v3024
        %vm3026 = vcmp.lt.s32.totalorder %v534, %v3024
        %vm3027 = vcmp.lt.s32.totalorder %v535, %v3024
        %vm3028 = vcmp.lt.s32.totalorder %v536, %v3024
        %v3029 = vsel %vm3025, %v2929, -inf
        %v3030 = vsel %vm3026, %v2932, -inf
        %v3031 = vsel %vm3027, %v2935, -inf
        %v3032 = vsel %vm3028, %v2938, -inf
        %v3033 = vsel %vm3025, %v2941, -inf
        %v3034 = vsel %vm3026, %v2944, -inf
        %v3035 = vsel %vm3027, %v2947, -inf
        %v3036 = vsel %vm3028, %v2950, -inf
        %v3037 = vsel %vm3025, %v2953, -inf
        %v3038 = vsel %vm3026, %v2956, -inf
        %v3039 = vsel %vm3027, %v2959, -inf
        %v3040 = vsel %vm3028, %v2962, -inf
        %v3041 = vsel %vm3025, %v2965, -inf
        %v3042 = vsel %vm3026, %v2968, -inf
        %v3043 = vsel %vm3027, %v2971, -inf
        %v3044 = vsel %vm3028, %v2974, -inf
        %v3045 = vsel %vm3025, %v2977, -inf
        %v3046 = vsel %vm3026, %v2980, -inf
        %v3047 = vsel %vm3027, %v2983, -inf
        %v3048 = vsel %vm3028, %v2986, -inf
        %v3049 = vsel %vm3025, %v2989, -inf
        %v3050 = vsel %vm3026, %v2992, -inf
        %v3051 = vsel %vm3027, %v2995, -inf
        %v3052 = vsel %vm3028, %v2998, -inf
        %v3053 = vsel %vm3025, %v3001, -inf
        %v3054 = vsel %vm3026, %v3004, -inf
        %v3055 = vsel %vm3027, %v3007, -inf
        %v3056 = vsel %vm3028, %v3010, -inf
        %v3057 = vsel %vm3025, %v3013, -inf
        %v3058 = vsel %vm3026, %v3016, -inf
        %v3059 = vsel %vm3027, %v3019, -inf
        %v3060 = vsel %vm3028, %v3022, -inf
        %v3061 = vsel %vm2542, %v3029, -inf
        %v3062 = vsel %vm2542, %v3030, -inf
        %v3063 = vmax.f32 %v3061, %v3062
        %v3064 = vsel %vm2542, %v3031, -inf
        %v3065 = vmax.f32 %v3063, %v3064
        %v3066 = vsel %vm2542, %v3032, -inf
        %v3067 = vmax.f32 %v3065, %v3066
        %v3068 = vrot.slane %v3067, 4
        %v3069 = vmax.f32 %v3067, %v3068
        %v3070 = vrot.slane %v3069, 2
        %v3071 = vmax.f32 %v3069, %v3070
        %v3072 = vrot.slane %v3071, 1
        %v3073 = vmax.f32 %v3071, %v3072
        %v3074 = vsel %vm2542, %v3033, -inf
        %v3075 = vsel %vm2542, %v3034, -inf
        %v3076 = vmax.f32 %v3074, %v3075
        %v3077 = vsel %vm2542, %v3035, -inf
        %v3078 = vmax.f32 %v3076, %v3077
        %v3079 = vsel %vm2542, %v3036, -inf
        %v3080 = vmax.f32 %v3078, %v3079
        %v3081 = vrot.slane %v3080, 4
        %v3082 = vmax.f32 %v3080, %v3081
        %v3083 = vrot.slane %v3082, 2
        %v3084 = vmax.f32 %v3082, %v3083
        %v3085 = vrot.slane %v3084, 1
        %v3086 = vmax.f32 %v3084, %v3085
        %v3087 = vsel %vm2542, %v3037, -inf
        %v3088 = vsel %vm2542, %v3038, -inf
        %v3089 = vmax.f32 %v3087, %v3088
        %v3090 = vsel %vm2542, %v3039, -inf
        %v3091 = vmax.f32 %v3089, %v3090
        %v3092 = vsel %vm2542, %v3040, -inf
        %v3093 = vmax.f32 %v3091, %v3092
        %v3094 = vrot.slane %v3093, 4
        %v3095 = vmax.f32 %v3093, %v3094
        %v3096 = vrot.slane %v3095, 2
        %v3097 = vmax.f32 %v3095, %v3096
        %v3098 = vrot.slane %v3097, 1
        %v3099 = vmax.f32 %v3097, %v3098
        %v3100 = vsel %vm2542, %v3041, -inf
        %v3101 = vsel %vm2542, %v3042, -inf
        %v3102 = vmax.f32 %v3100, %v3101
        %v3103 = vsel %vm2542, %v3043, -inf
        %v3104 = vmax.f32 %v3102, %v3103
        %v3105 = vsel %vm2542, %v3044, -inf
        %v3106 = vmax.f32 %v3104, %v3105
        %v3107 = vrot.slane %v3106, 4
        %v3108 = vmax.f32 %v3106, %v3107
        %v3109 = vrot.slane %v3108, 2
        %v3110 = vmax.f32 %v3108, %v3109
        %v3111 = vrot.slane %v3110, 1
        %v3112 = vmax.f32 %v3110, %v3111
        %v3113 = vsel %vm2542, %v3045, -inf
        %v3114 = vsel %vm2542, %v3046, -inf
        %v3115 = vmax.f32 %v3113, %v3114
        %v3116 = vsel %vm2542, %v3047, -inf
        %v3117 = vmax.f32 %v3115, %v3116
        %v3118 = vsel %vm2542, %v3048, -inf
        %v3119 = vmax.f32 %v3117, %v3118
        %v3120 = vrot.slane %v3119, 4
        %v3121 = vmax.f32 %v3119, %v3120
        %v3122 = vrot.slane %v3121, 2
        %v3123 = vmax.f32 %v3121, %v3122
        %v3124 = vrot.slane %v3123, 1
        %v3125 = vmax.f32 %v3123, %v3124
        %v3126 = vsel %vm2542, %v3049, -inf
        %v3127 = vsel %vm2542, %v3050, -inf
        %v3128 = vmax.f32 %v3126, %v3127
        %v3129 = vsel %vm2542, %v3051, -inf
        %v3130 = vmax.f32 %v3128, %v3129
        %v3131 = vsel %vm2542, %v3052, -inf
        %v3132 = vmax.f32 %v3130, %v3131
        %v3133 = vrot.slane %v3132, 4
        %v3134 = vmax.f32 %v3132, %v3133
        %v3135 = vrot.slane %v3134, 2
        %v3136 = vmax.f32 %v3134, %v3135
        %v3137 = vrot.slane %v3136, 1
        %v3138 = vmax.f32 %v3136, %v3137
        %v3139 = vsel %vm2542, %v3053, -inf
        %v3140 = vsel %vm2542, %v3054, -inf
        %v3141 = vmax.f32 %v3139, %v3140
        %v3142 = vsel %vm2542, %v3055, -inf
        %v3143 = vmax.f32 %v3141, %v3142
        %v3144 = vsel %vm2542, %v3056, -inf
        %v3145 = vmax.f32 %v3143, %v3144
        %v3146 = vrot.slane %v3145, 4
        %v3147 = vmax.f32 %v3145, %v3146
        %v3148 = vrot.slane %v3147, 2
        %v3149 = vmax.f32 %v3147, %v3148
        %v3150 = vrot.slane %v3149, 1
        %v3151 = vmax.f32 %v3149, %v3150
        %v3152 = vsel %vm2542, %v3057, -inf
        %v3153 = vsel %vm2542, %v3058, -inf
        %v3154 = vmax.f32 %v3152, %v3153
        %v3155 = vsel %vm2542, %v3059, -inf
        %v3156 = vmax.f32 %v3154, %v3155
        %v3157 = vsel %vm2542, %v3060, -inf
        %v3158 = vmax.f32 %v3156, %v3157
        %v3159 = vrot.slane %v3158, 4
        %v3160 = vmax.f32 %v3158, %v3159
        %v3161 = vrot.slane %v3160, 2
        %v3162 = vmax.f32 %v3160, %v3161
        %v3163 = vrot.slane %v3162, 1
        %v3164 = vmax.f32 %v3162, %v3163
        %v3165 = vld [vmem:[%s2] sm:$0x1]
        %v3167 = vperm.slane %v3165, 0
        %v3169 = vadd.f32 %v3073, %v3167
        %v3170 = vadd.f32 %v3086, %v3167
        %v3171 = vadd.f32 %v3099, %v3167
        %v3172 = vadd.f32 %v3112, %v3167
        %v3173 = vadd.f32 %v3125, %v3167
        %v3174 = vadd.f32 %v3138, %v3167
        %v3175 = vadd.f32 %v3151, %v3167
        %v3176 = vadd.f32 %v3164, %v3167
        %v3177 = vld [vmem:[%s4] sm:$0xff]
        %v3178 = vld [vmem:[%s4 + $0x8] sm:$0xff]
        %v3179 = vld [vmem:[%s4 + $0x10] sm:$0xff]
        %v3180 = vld [vmem:[%s4 + $0x18] sm:$0xff]
        %v3181 = vld [vmem:[%s5] sm:$0x1]
        %v3183 = vperm.slane %v3181, 0
        %v3193 = vrot.slane %v3170, 7
        %vm3194 = vcmask 1041409
        %v3195 = vsel %vm3194, %v3193, %v3169
        %v3196 = vrot.slane %v3171, 6
        %vm3197 = vcmask 1042434
        %v3198 = vsel %vm3197, %v3196, %v3195
        %v3199 = vrot.slane %v3172, 5
        %vm3200 = vcmask 1043459
        %v3201 = vsel %vm3200, %v3199, %v3198
        %v3202 = vrot.slane %v3173, 4
        %vm3203 = vcmask 1044484
        %v3204 = vsel %vm3203, %v3202, %v3201
        %v3205 = vrot.slane %v3174, 3
        %vm3206 = vcmask 1045509
        %v3207 = vsel %vm3206, %v3205, %v3204
        %v3208 = vrot.slane %v3175, 2
        %vm3209 = vcmask 1046534
        %v3210 = vsel %vm3209, %v3208, %v3207
        %v3211 = vrot.slane %v3176, 1
        %vm3212 = vcmask 1047559
        %v3213 = vsel %vm3212, %v3211, %v3210
        %v3214 = vsel %vm2542, %v3213, 0
        %3216 = vmatpush.msra.mxu0 0.0
        %3217 = vmatpush.msra.mxu0 0.0
        %3218 = vmatpush.msra.mxu0 0.0
        %3219 = vmatpush.msra.mxu0 0.0
        %3220 = vmatpush.msra.mxu0 0.0
        %3221 = vmatpush.msra.mxu0 0.0
        %3222 = vmatpush.msra.mxu0 0.0
        %3223 = vmatpush.msra.mxu0 0.0
        %3224 = vmatpush.msra.mxu0 0.0
        %3225 = vmatpush.msra.mxu0 0.0
        %3226 = vmatpush.msra.mxu0 0.0
        %3227 = vmatpush.msra.mxu0 0.0
        %3228 = vmatpush.msra.mxu0 %v3180
        %3229 = vmatpush.msra.mxu0 %v3179
        %3230 = vmatpush.msra.mxu0 %v3178
        %3231 = vmatpush.msra.mxu0 %v3177
        %3232 = vmatmul.f32.gmra.mxu0 %v3214
        %v3233 = vpop.f32.mrf.mxu0
        %v3234 = vadd.f32 %v3183, %v3233
        %3235 = vdwg.mxu0
        %v3236 = vmul.f32 %v3234, 0.01
        %v3237 = vmax.f32 %v3234, %v3236
        %3238 = vst.msk [vmem:[%s260] sm:$0xff] %vm2542, %v3237
        %s3239 = sand.u32 %s160, 1
        %s3240 = scalar_lea.sflag [#allocation4], %s3239
        %s3241 = sand.u32 %s160, 1
        %s3242 = smul.addr %s3241, 8
        %s3243 = scalar_lea.vmem [#allocation5], %s3242
        // Predicated region
        $region49: #{tpu_custom_call.1} parent=43 // pred_check
          %p3244 = pneg %p170
        $region50: #{tpu_custom_call.1} parent=43 // pred_check_branch
          %3246 = sbr.rel (%p3244) target = $region52
        $region51: #{tpu_custom_call.1} parent=43 // pred_region
          %3248 = vsyncadd %s3240, 0
          %s3249 = smul.addr %s21, 8
          %s3250 = scalar_lea.hbm %s6, %s3249
          %s3252 = sshll.u32 %s3243, 4
          %s3253 = int_to_ptr.vmem [resolvable:$true] %s3252
          %s3254 = sshll.u32 %s3250, 4
          %s3255 = int_to_ptr.hbm [resolvable:$true] %s3254
          %3257 = dma.vmem_to_hbm [thread:$0]  %s3253, 128, %s3255, %s3240
        $region52: #{tpu_custom_call.1} parent=43 // pred_fallthru
          _
      $region44: #{tpu_custom_call.1} parent=5 // pred_fallthru
        _
      %p3258 = scmp.le.s32.totalorder 2, %s16
      // Predicated region
      $region53: #{tpu_custom_call.1} parent=5 // pred_check
        %p3259 = pneg %p3258
      $region54: #{tpu_custom_call.1} parent=5 // pred_check_branch
        %3261 = sbr.rel (%p3259) target = $region56
      $region55: #{tpu_custom_call.1} parent=5 // pred_region
        %s3262 = ssub.s32 %s16, 2
        // Predicated region
        $region57: #{tpu_custom_call.1} parent=55 // pred_check
          %p3263 = pneg %p176
        $region58: #{tpu_custom_call.1} parent=55 // pred_check_branch
          %3265 = sbr.rel (%p3263) target = $region60
        $region59: #{tpu_custom_call.1} parent=55 // pred_region
          %s3266 = sand.u32 %s161, 1
          %s3267 = scalar_lea.sflag [#allocation4], %s3266
          %s3268 = sand.u32 %s161, 1
          %s3269 = smul.addr %s3268, 8
          %s3270 = scalar_lea.vmem [#allocation5], %s3269
          %3272 = dma.done %s3267, 128
        $region60: #{tpu_custom_call.1} parent=55 // pred_fallthru
          _
      $region56: #{tpu_custom_call.1} parent=5 // pred_fallthru
        _
    $region6: #{tpu_custom_call.1} parent=1 // loop_footer
      %s20 = sadd.s32 1, %s16
    $region7: #{tpu_custom_call.1} parent=1 // loop_footer_branch
      %15 = sbr.rel target = $region3
    $region8: #{tpu_custom_call.1} parent=1 // loop_exit
      _
    %3273 = vsyncpa [#allocation3], 1
    %s3274 = scalar_lea.sflag [#allocation3], 1
    %3275 = vsyncpa %s3274, 1
    %3276 = vsyncpa [#allocation4], 1
    %s3277 = scalar_lea.sflag [#allocation4], 1
    %3278 = vsyncpa %s3277, 1

</llo_original>
